<compile_context>
chip_gen: v6e
topology: v6e:2x2x1
jax: 0.10.0
libtpu: 0.0.40
codegen_flags: <defaults>
</compile_context>

<pallas_src>
import functools
import math

import jax
import jax.numpy as jnp
from jax import lax
from jax.experimental import pallas as pl
from jax.experimental.pallas import tpu as pltpu

LN_EPS = 1e-5
LEAKY_SLOPE = 0.01       # torch.nn.LeakyReLU default
NEG_INF = -1e30          # finite large negative for masking (avoids -inf -> NaN)


def _layernorm(x, gamma, beta):
    mu = jnp.mean(x, axis=-1, keepdims=True)
    var = jnp.mean((x - mu) ** 2, axis=-1, keepdims=True)
    return (x - mu) * lax.rsqrt(var + LN_EPS) * gamma + beta


def _mlp_num_chunks(hidden, target=2048):
    """Smallest chunk count s.t. each chunk <= target and chunks divide `hidden`."""
    if hidden <= target:
        return 1
    n = -(-hidden // target)
    while hidden % n:
        n += 1
    return n


def _block_kernel(n_head,
                  x_ref,
                  ln1_g_ref, ln1_b_ref,
                  wqkv_ref, bqkv_ref,
                  wp_ref, bp_ref,
                  ln2_g_ref, ln2_b_ref,
                  w1_ref, b1_ref, w2_ref, b2_ref,
                  o_ref):
    x = x_ref[0]                       # (T, C) f32
    T, C = x.shape
    hd = C // n_head

    # ---- ln1 (f32) ----
    h_bf = _layernorm(x, ln1_g_ref[...], ln1_b_ref[...]).astype(jnp.bfloat16)

    # ---- fused qkv projection: one MXU pass, bf16 operands, f32 accumulation ----
    qkv = jnp.dot(h_bf, wqkv_ref[...],
                  preferred_element_type=jnp.float32) + bqkv_ref[...]   # (T, 3C) f32
    # q is already pre-scaled by 1/sqrt(hd) (folded into wq/bq at the boundary).
    q_bf = qkv[:, 0:C].astype(jnp.bfloat16)
    k_bf = qkv[:, C:2 * C].astype(jnp.bfloat16)
    v_bf = qkv[:, 2 * C:3 * C].astype(jnp.bfloat16)

    # ---- causal mask (built once, shared by all heads) ----
    rows = lax.broadcasted_iota(jnp.int32, (T, T), 0)
    cols = lax.broadcasted_iota(jnp.int32, (T, T), 1)
    causal = rows >= cols

    # ---- per-head attention with the output projection fused into the loop ----
    # attn_out = concat_h(head_h) @ wp == sum_h head_h @ wp[h*hd:(h+1)*hd, :]
    attn_acc = jnp.zeros((T, C), jnp.float32)
    for hidx in range(n_head):
        sl = slice(hidx * hd, (hidx + 1) * hd)
        qh, kh, vh = q_bf[:, sl], k_bf[:, sl], v_bf[:, sl]     # (T, hd) bf16

        # q @ k^T via dot_general (contract feature dims) -- no explicit transpose.
        att = lax.dot_general(qh, kh, (((1,), (1,)), ((), ())),
                              preferred_element_type=jnp.float32)   # (T, T) f32
        att = jnp.where(causal, att, NEG_INF)
        att = att - jnp.max(att, axis=-1, keepdims=True)
        p = jnp.exp(att)
        p = p * pl.reciprocal(jnp.sum(p, axis=-1, keepdims=True), approx=True)

        head = lax.dot_general(p.astype(jnp.bfloat16), vh,
                               (((1,), (0,)), ((), ())),
                               preferred_element_type=jnp.float32)  # (T, hd) f32
        attn_acc = attn_acc + jnp.dot(head.astype(jnp.bfloat16), wp_ref[sl, :],
                                      preferred_element_type=jnp.float32)

    # ---- residual (stream stays f32) ----
    x1 = x + attn_acc + bp_ref[...]

    # ---- ln2 + MLP(LeakyReLU), hidden dim tiled, + residual ----
    h2_bf = _layernorm(x1, ln2_g_ref[...], ln2_b_ref[...]).astype(jnp.bfloat16)
    hidden = w1_ref.shape[1]
    n_chunks = _mlp_num_chunks(hidden)
    chunk = hidden // n_chunks
    mlp_acc = jnp.zeros((T, C), jnp.float32)
    for c in range(n_chunks):
        csl = slice(c * chunk, (c + 1) * chunk)
        m = jnp.dot(h2_bf, w1_ref[:, csl],
                    preferred_element_type=jnp.float32) + b1_ref[:, csl]
        m = jnp.where(m >= 0, m, LEAKY_SLOPE * m)              # LeakyReLU in f32
        mlp_acc = mlp_acc + jnp.dot(m.astype(jnp.bfloat16), w2_ref[csl, :],
                                    preferred_element_type=jnp.float32)

    o_ref[0] = (x1 + mlp_acc + b2_ref[...]).astype(o_ref.dtype)


def _pick_vmem_limit():
    """Per-generation scoped-VMEM limit (leave headroom below physical)."""
    cap = None
    try:
        cap = int(pltpu.get_tpu_info().vmem_capacity_bytes)
    except Exception:
        cap = None
    if not cap:
        return 48 * 1024 * 1024                       # conservative, works everywhere
    if cap >= 128 * 1024 * 1024:                      # v5e / v6e (128 MiB physical)
        return 100 * 1024 * 1024
    return max(32 * 1024 * 1024,                      # v7x (64 MiB physical)
               min(cap - 16 * 1024 * 1024, 48 * 1024 * 1024))


def transformer_block(x, params, n_head):
    """x: (B, T, C) float32. params: dict of 2-D weights. Returns (B, T, C)."""
    B, T, C = x.shape
    hd = C // n_head
    scale = 1.0 / math.sqrt(hd)

    # Fuse q/k/v weights into one (C, 3C) matrix and fold the attention scale into
    # the q columns / bias.  Weight matrices go to bf16 at the boundary (halves
    # VMEM residency and feeds the MXU at its bf16 rate); biases / LN params stay
    # f32.  In real use these fused/casted weights would be prepared once, not per
    # call.
    wqkv = jnp.concatenate(
        [params["wq"] * scale, params["wk"], params["wv"]], axis=1
    ).astype(jnp.bfloat16)
    bqkv = jnp.concatenate(
        [params["bq"] * scale, params["bk"], params["bv"]], axis=1
    ).astype(jnp.float32)

    plist = [
        params["ln1_g"], params["ln1_b"],
        wqkv, bqkv,
        params["wp"].astype(jnp.bfloat16), params["bp"],
        params["ln2_g"], params["ln2_b"],
        params["w1"].astype(jnp.bfloat16), params["b1"],
        params["w2"].astype(jnp.bfloat16), params["b2"],
    ]

    x_spec = pl.BlockSpec((1, T, C), lambda b: (b, 0, 0))
    # Constant index_map for all parameters: same (full) block every grid step.
    param_specs = [pl.BlockSpec(p.shape, lambda b: (0, 0)) for p in plist]

    kernel = functools.partial(_block_kernel, n_head)
    return pl.pallas_call(
        kernel,
        out_shape=jax.ShapeDtypeStruct((B, T, C), x.dtype),
        grid_spec=pltpu.PrefetchScalarGridSpec(
            num_scalar_prefetch=0,
            grid=(B,),
            in_specs=[x_spec] + param_specs,
            out_specs=pl.BlockSpec((1, T, C), lambda b: (b, 0, 0)),
        ),
        compiler_params=pltpu.CompilerParams(
            dimension_semantics=("parallel",),
            vmem_limit_bytes=_pick_vmem_limit(),
        ),
    )(x, *plist)


# ---------------- pure-JAX reference (f32) for correctness check ----------------
def reference_block(x, p, n_head):
    B, T, C = x.shape
    hd = C // n_head

    def ln(z, g, b):
        mu = jnp.mean(z, axis=-1, keepdims=True)
        var = jnp.mean((z - mu) ** 2, axis=-1, keepdims=True)
        return (z - mu) / jnp.sqrt(var + LN_EPS) * g + b

    h = ln(x, p["ln1_g"], p["ln1_b"])
    q = h @ p["wq"] + p["bq"]
    k = h @ p["wk"] + p["bk"]
    v = h @ p["wv"] + p["bv"]
    q = q.reshape(B, T, n_head, hd).transpose(0, 2, 1, 3)
    k = k.reshape(B, T, n_head, hd).transpose(0, 2, 1, 3)
    v = v.reshape(B, T, n_head, hd).transpose(0, 2, 1, 3)
    att = jnp.einsum("bhtd,bhsd->bhts", q, k) / math.sqrt(hd)
    mask = jnp.tril(jnp.ones((T, T), dtype=bool))
    att = jnp.where(mask[None, None], att, -jnp.inf)
    att = jax.nn.softmax(att, axis=-1)
    y = jnp.einsum("bhts,bhsd->bhtd", att, v)
    y = y.transpose(0, 2, 1, 3).reshape(B, T, C)
    x1 = x + (y @ p["wp"] + p["bp"])
    h2 = ln(x1, p["ln2_g"], p["ln2_b"])
    m = h2 @ p["w1"] + p["b1"]
    m = jnp.where(m >= 0, m, LEAKY_SLOPE * m)
    m = m @ p["w2"] + p["b2"]
    return x1 + m


if __name__ == "__main__":
    # small config: n_embd=32, n_head=4, block_size=seq=8, batch=2
    # NOTE: below one vreg tile -- purely a correctness config; benchmark at
    # T>=1024, C>=768 for any performance conclusions.
    B, T, C, H = 2, 8, 32, 4

    key = jax.random.PRNGKey(0)
    keys = jax.random.split(key, 12)
    s = 0.1
    params = {
        "ln1_g": jnp.ones((1, C), jnp.float32),
        "ln1_b": jnp.zeros((1, C), jnp.float32),
        "wq": s * jax.random.normal(keys[0], (C, C), jnp.float32),
        "bq": s * jax.random.normal(keys[1], (1, C), jnp.float32),
        "wk": s * jax.random.normal(keys[2], (C, C), jnp.float32),
        "bk": s * jax.random.normal(keys[3], (1, C), jnp.float32),
        "wv": s * jax.random.normal(keys[4], (C, C), jnp.float32),
        "bv": s * jax.random.normal(keys[5], (1, C), jnp.float32),
        "wp": s * jax.random.normal(keys[6], (C, C), jnp.float32),
        "bp": s * jax.random.normal(keys[7], (1, C), jnp.float32),
        "ln2_g": jnp.ones((1, C), jnp.float32),
        "ln2_b": jnp.zeros((1, C), jnp.float32),
        "w1": s * jax.random.normal(keys[8], (C, 4 * C), jnp.float32),
        "b1": s * jax.random.normal(keys[9], (1, 4 * C), jnp.float32),
        "w2": s * jax.random.normal(keys[10], (4 * C, C), jnp.float32),
        "b2": s * jax.random.normal(keys[11], (1, C), jnp.float32),
    }

    x = jax.random.normal(jax.random.PRNGKey(42), (B, T, C), jnp.float32)

    out = transformer_block(x, params, H)
    out = jax.block_until_ready(out)

    ref = reference_block(x, params, H)
    assert out.shape == (B, T, C)
    # bf16 MXU operands + approx reciprocal -> compare against f32 reference with
    # a correspondingly relaxed tolerance.
    max_err = jnp.max(jnp.abs(out - ref))
    assert jnp.allclose(out, ref, atol=5e-2, rtol=5e-2), f"max err {max_err}"

    print("KERNEL_OK")
</pallas_src>

<mosaic_0001>
module attributes {stable_mosaic.version = 11 : i64} {
  func.func @_block_kernel(%arg0: i32, %arg1: memref<1x8x32xf32, #tpu.memory_space<vmem>>, %arg2: memref<1x32xf32, #tpu.memory_space<vmem>>, %arg3: memref<1x32xf32, #tpu.memory_space<vmem>>, %arg4: memref<32x96xbf16, #tpu.memory_space<vmem>>, %arg5: memref<1x96xf32, #tpu.memory_space<vmem>>, %arg6: memref<32x32xbf16, #tpu.memory_space<vmem>>, %arg7: memref<1x32xf32, #tpu.memory_space<vmem>>, %arg8: memref<1x32xf32, #tpu.memory_space<vmem>>, %arg9: memref<1x32xf32, #tpu.memory_space<vmem>>, %arg10: memref<32x128xbf16, #tpu.memory_space<vmem>>, %arg11: memref<1x128xf32, #tpu.memory_space<vmem>>, %arg12: memref<128x32xbf16, #tpu.memory_space<vmem>>, %arg13: memref<1x32xf32, #tpu.memory_space<vmem>>, %arg14: memref<1x8x32xf32, #tpu.memory_space<vmem>>) attributes {dimension_semantics = [#tpu.dimension_semantics<parallel>], iteration_bounds = array<i64: 2>, scalar_prefetch = 0 : i64, scratch_operands = 0 : i64, tpu.core_type = #tpu.core_type<tc>, window_params = [{transform_indices = @transform_0, window_bounds = array<i64: 1, 8, 32>}, {pipeline_mode = #tpu.pipeline_mode<synchronous>, transform_indices = @transform_1, window_bounds = array<i64: 1, 32>}, {pipeline_mode = #tpu.pipeline_mode<synchronous>, transform_indices = @transform_2, window_bounds = array<i64: 1, 32>}, {pipeline_mode = #tpu.pipeline_mode<synchronous>, transform_indices = @transform_3, window_bounds = array<i64: 32, 96>}, {pipeline_mode = #tpu.pipeline_mode<synchronous>, transform_indices = @transform_4, window_bounds = array<i64: 1, 96>}, {pipeline_mode = #tpu.pipeline_mode<synchronous>, transform_indices = @transform_5, window_bounds = array<i64: 32, 32>}, {pipeline_mode = #tpu.pipeline_mode<synchronous>, transform_indices = @transform_6, window_bounds = array<i64: 1, 32>}, {pipeline_mode = #tpu.pipeline_mode<synchronous>, transform_indices = @transform_7, window_bounds = array<i64: 1, 32>}, {pipeline_mode = #tpu.pipeline_mode<synchronous>, transform_indices = @transform_8, window_bounds = array<i64: 1, 32>}, {pipeline_mode = #tpu.pipeline_mode<synchronous>, transform_indices = @transform_9, window_bounds = array<i64: 32, 128>}, {pipeline_mode = #tpu.pipeline_mode<synchronous>, transform_indices = @transform_10, window_bounds = array<i64: 1, 128>}, {pipeline_mode = #tpu.pipeline_mode<synchronous>, transform_indices = @transform_11, window_bounds = array<i64: 128, 32>}, {pipeline_mode = #tpu.pipeline_mode<synchronous>, transform_indices = @transform_12, window_bounds = array<i64: 1, 32>}, {transform_indices = @transform_13, window_bounds = array<i64: 1, 8, 32>}]} {
    %c0 = arith.constant 0 : index
    %c0_0 = arith.constant 0 : index
    %c0_1 = arith.constant 0 : index
    %0 = vector.load %arg1[%c0, %c0_0, %c0_1] : memref<1x8x32xf32, #tpu.memory_space<vmem>>, vector<1x8x32xf32>
    %1 = vector.shape_cast %0 : vector<1x8x32xf32> to vector<8x32xf32>
    %c0_2 = arith.constant 0 : index
    %c0_3 = arith.constant 0 : index
    %2 = vector.load %arg2[%c0_2, %c0_3] : memref<1x32xf32, #tpu.memory_space<vmem>>, vector<1x32xf32>
    %c0_4 = arith.constant 0 : index
    %c0_5 = arith.constant 0 : index
    %3 = vector.load %arg3[%c0_4, %c0_5] : memref<1x32xf32, #tpu.memory_space<vmem>>, vector<1x32xf32>
    %cst = arith.constant dense<0.000000e+00> : vector<8xf32>
    %4 = vector.multi_reduction <add>, %1, %cst [1] : vector<8x32xf32> to vector<8xf32>
    %5 = vector.shape_cast %4 : vector<8xf32> to vector<8x1xf32>
    %cst_6 = arith.constant 3.200000e+01 : f32
    %6 = vector.broadcast %cst_6 : f32 to vector<8x1xf32>
    %7 = arith.divf %5, %6 : vector<8x1xf32>
    %8 = vector.broadcast %7 : vector<8x1xf32> to vector<8x32xf32>
    %9 = arith.subf %1, %8 : vector<8x32xf32>
    %10 = arith.mulf %9, %9 : vector<8x32xf32>
    %cst_7 = arith.constant dense<0.000000e+00> : vector<8xf32>
    %11 = vector.multi_reduction <add>, %10, %cst_7 [1] : vector<8x32xf32> to vector<8xf32>
    %12 = vector.shape_cast %11 : vector<8xf32> to vector<8x1xf32>
    %cst_8 = arith.constant 3.200000e+01 : f32
    %13 = vector.broadcast %cst_8 : f32 to vector<8x1xf32>
    %14 = arith.divf %12, %13 : vector<8x1xf32>
    %15 = vector.broadcast %7 : vector<8x1xf32> to vector<8x32xf32>
    %16 = arith.subf %1, %15 : vector<8x32xf32>
    %cst_9 = arith.constant 9.99999974E-6 : f32
    %17 = vector.broadcast %cst_9 : f32 to vector<8x1xf32>
    %18 = arith.addf %14, %17 : vector<8x1xf32>
    %19 = math.rsqrt %18 : vector<8x1xf32>
    %20 = vector.broadcast %19 : vector<8x1xf32> to vector<8x32xf32>
    %21 = arith.mulf %16, %20 : vector<8x32xf32>
    %22 = vector.broadcast %2 : vector<1x32xf32> to vector<8x32xf32>
    %23 = arith.mulf %21, %22 : vector<8x32xf32>
    %24 = vector.broadcast %3 : vector<1x32xf32> to vector<8x32xf32>
    %25 = arith.addf %23, %24 : vector<8x32xf32>
    %26 = arith.truncf %25 : vector<8x32xf32> to vector<8x32xbf16>
    %c0_10 = arith.constant 0 : index
    %c0_11 = arith.constant 0 : index
    %27 = vector.load %arg4[%c0_10, %c0_11] : memref<32x96xbf16, #tpu.memory_space<vmem>>, vector<32x96xbf16>
    %cst_12 = arith.constant dense<0.000000e+00> : vector<8x96xf32>
    %28 = tpu.matmul %26, %27, %cst_12 {dimension_numbers = #tpu.dot_dimension_numbers<[1], [0], [0], [1], [0, 0, 1, 1], [], []>} : vector<8x32xbf16>, vector<32x96xbf16>, vector<8x96xf32> -> vector<8x96xf32>
    %c0_13 = arith.constant 0 : index
    %c0_14 = arith.constant 0 : index
    %29 = vector.load %arg5[%c0_13, %c0_14] : memref<1x96xf32, #tpu.memory_space<vmem>>, vector<1x96xf32>
    %30 = vector.broadcast %29 : vector<1x96xf32> to vector<8x96xf32>
    %31 = arith.addf %28, %30 : vector<8x96xf32>
    %32 = vector.extract_strided_slice %31 {offsets = [0, 0], sizes = [8, 32], strides = [1, 1]} : vector<8x96xf32> to vector<8x32xf32>
    %33 = arith.truncf %32 : vector<8x32xf32> to vector<8x32xbf16>
    %34 = vector.extract_strided_slice %31 {offsets = [0, 32], sizes = [8, 32], strides = [1, 1]} : vector<8x96xf32> to vector<8x32xf32>
    %35 = arith.truncf %34 : vector<8x32xf32> to vector<8x32xbf16>
    %36 = vector.extract_strided_slice %31 {offsets = [0, 64], sizes = [8, 32], strides = [1, 1]} : vector<8x96xf32> to vector<8x32xf32>
    %37 = arith.truncf %36 : vector<8x32xf32> to vector<8x32xbf16>
    %38 = tpu.iota {dimensions = array<i32: 0>} : vector<8x8xi32>
    %39 = tpu.iota {dimensions = array<i32: 1>} : vector<8x8xi32>
    %40 = arith.cmpi sge, %38, %39 : vector<8x8xi32>
    %cst_15 = arith.constant 0.000000e+00 : f32
    %41 = vector.broadcast %cst_15 : f32 to vector<8x32xf32>
    %42 = vector.extract_strided_slice %33 {offsets = [0, 0], sizes = [8, 8], strides = [1, 1]} : vector<8x32xbf16> to vector<8x8xbf16>
    %43 = vector.extract_strided_slice %35 {offsets = [0, 0], sizes = [8, 8], strides = [1, 1]} : vector<8x32xbf16> to vector<8x8xbf16>
    %44 = vector.extract_strided_slice %37 {offsets = [0, 0], sizes = [8, 8], strides = [1, 1]} : vector<8x32xbf16> to vector<8x8xbf16>
    %cst_16 = arith.constant dense<0.000000e+00> : vector<8x8xf32>
    %45 = tpu.matmul %42, %43, %cst_16 {dimension_numbers = #tpu.dot_dimension_numbers<[1], [1], [0], [0], [0, 0, 1, 0], [], []>} : vector<8x8xbf16>, vector<8x8xbf16>, vector<8x8xf32> -> vector<8x8xf32>
    %cst_17 = arith.constant -1.000000e+30 : f32
    %46 = vector.broadcast %cst_17 : f32 to vector<8x8xf32>
    %47 = arith.select %40, %45, %46 : vector<8x8xi1>, vector<8x8xf32>
    %cst_18 = arith.constant dense<0xFF800000> : vector<8xf32>
    %48 = vector.multi_reduction <maximumf>, %47, %cst_18 [1] : vector<8x8xf32> to vector<8xf32>
    %49 = vector.shape_cast %48 : vector<8xf32> to vector<8x1xf32>
    %50 = vector.broadcast %49 : vector<8x1xf32> to vector<8x8xf32>
    %51 = arith.subf %47, %50 : vector<8x8xf32>
    %52 = math.exp %51 : vector<8x8xf32>
    %cst_19 = arith.constant dense<0.000000e+00> : vector<8xf32>
    %53 = vector.multi_reduction <add>, %52, %cst_19 [1] : vector<8x8xf32> to vector<8xf32>
    %54 = vector.shape_cast %53 : vector<8xf32> to vector<8x1xf32>
    %55 = tpu.reciprocal %54 {approx = true} : vector<8x1xf32> -> vector<8x1xf32>
    %56 = vector.broadcast %55 : vector<8x1xf32> to vector<8x8xf32>
    %57 = arith.mulf %52, %56 : vector<8x8xf32>
    %58 = arith.truncf %57 : vector<8x8xf32> to vector<8x8xbf16>
    %cst_20 = arith.constant dense<0.000000e+00> : vector<8x8xf32>
    %59 = tpu.matmul %58, %44, %cst_20 {dimension_numbers = #tpu.dot_dimension_numbers<[1], [0], [0], [1], [0, 0, 1, 1], [], []>} : vector<8x8xbf16>, vector<8x8xbf16>, vector<8x8xf32> -> vector<8x8xf32>
    %60 = arith.truncf %59 : vector<8x8xf32> to vector<8x8xbf16>
    %c0_21 = arith.constant 0 : index
    %c0_22 = arith.constant 0 : index
    %61 = vector.load %arg6[%c0_21, %c0_22] : memref<32x32xbf16, #tpu.memory_space<vmem>>, vector<8x32xbf16>
    %cst_23 = arith.constant dense<0.000000e+00> : vector<8x32xf32>
    %62 = tpu.matmul %60, %61, %cst_23 {dimension_numbers = #tpu.dot_dimension_numbers<[1], [0], [0], [1], [0, 0, 1, 1], [], []>} : vector<8x8xbf16>, vector<8x32xbf16>, vector<8x32xf32> -> vector<8x32xf32>
    %63 = arith.addf %41, %62 : vector<8x32xf32>
    %64 = vector.extract_strided_slice %33 {offsets = [0, 8], sizes = [8, 8], strides = [1, 1]} : vector<8x32xbf16> to vector<8x8xbf16>
    %65 = vector.extract_strided_slice %35 {offsets = [0, 8], sizes = [8, 8], strides = [1, 1]} : vector<8x32xbf16> to vector<8x8xbf16>
    %66 = vector.extract_strided_slice %37 {offsets = [0, 8], sizes = [8, 8], strides = [1, 1]} : vector<8x32xbf16> to vector<8x8xbf16>
    %cst_24 = arith.constant dense<0.000000e+00> : vector<8x8xf32>
    %67 = tpu.matmul %64, %65, %cst_24 {dimension_numbers = #tpu.dot_dimension_numbers<[1], [1], [0], [0], [0, 0, 1, 0], [], []>} : vector<8x8xbf16>, vector<8x8xbf16>, vector<8x8xf32> -> vector<8x8xf32>
    %cst_25 = arith.constant -1.000000e+30 : f32
    %68 = vector.broadcast %cst_25 : f32 to vector<8x8xf32>
    %69 = arith.select %40, %67, %68 : vector<8x8xi1>, vector<8x8xf32>
    %cst_26 = arith.constant dense<0xFF800000> : vector<8xf32>
    %70 = vector.multi_reduction <maximumf>, %69, %cst_26 [1] : vector<8x8xf32> to vector<8xf32>
    %71 = vector.shape_cast %70 : vector<8xf32> to vector<8x1xf32>
    %72 = vector.broadcast %71 : vector<8x1xf32> to vector<8x8xf32>
    %73 = arith.subf %69, %72 : vector<8x8xf32>
    %74 = math.exp %73 : vector<8x8xf32>
    %cst_27 = arith.constant dense<0.000000e+00> : vector<8xf32>
    %75 = vector.multi_reduction <add>, %74, %cst_27 [1] : vector<8x8xf32> to vector<8xf32>
    %76 = vector.shape_cast %75 : vector<8xf32> to vector<8x1xf32>
    %77 = tpu.reciprocal %76 {approx = true} : vector<8x1xf32> -> vector<8x1xf32>
    %78 = vector.broadcast %77 : vector<8x1xf32> to vector<8x8xf32>
    %79 = arith.mulf %74, %78 : vector<8x8xf32>
    %80 = arith.truncf %79 : vector<8x8xf32> to vector<8x8xbf16>
    %cst_28 = arith.constant dense<0.000000e+00> : vector<8x8xf32>
    %81 = tpu.matmul %80, %66, %cst_28 {dimension_numbers = #tpu.dot_dimension_numbers<[1], [0], [0], [1], [0, 0, 1, 1], [], []>} : vector<8x8xbf16>, vector<8x8xbf16>, vector<8x8xf32> -> vector<8x8xf32>
    %82 = arith.truncf %81 : vector<8x8xf32> to vector<8x8xbf16>
    %c8 = arith.constant 8 : index
    %c0_29 = arith.constant 0 : index
    %83 = vector.load %arg6[%c8, %c0_29] : memref<32x32xbf16, #tpu.memory_space<vmem>>, vector<8x32xbf16>
    %cst_30 = arith.constant dense<0.000000e+00> : vector<8x32xf32>
    %84 = tpu.matmul %82, %83, %cst_30 {dimension_numbers = #tpu.dot_dimension_numbers<[1], [0], [0], [1], [0, 0, 1, 1], [], []>} : vector<8x8xbf16>, vector<8x32xbf16>, vector<8x32xf32> -> vector<8x32xf32>
    %85 = arith.addf %63, %84 : vector<8x32xf32>
    %86 = vector.extract_strided_slice %33 {offsets = [0, 16], sizes = [8, 8], strides = [1, 1]} : vector<8x32xbf16> to vector<8x8xbf16>
    %87 = vector.extract_strided_slice %35 {offsets = [0, 16], sizes = [8, 8], strides = [1, 1]} : vector<8x32xbf16> to vector<8x8xbf16>
    %88 = vector.extract_strided_slice %37 {offsets = [0, 16], sizes = [8, 8], strides = [1, 1]} : vector<8x32xbf16> to vector<8x8xbf16>
    %cst_31 = arith.constant dense<0.000000e+00> : vector<8x8xf32>
    %89 = tpu.matmul %86, %87, %cst_31 {dimension_numbers = #tpu.dot_dimension_numbers<[1], [1], [0], [0], [0, 0, 1, 0], [], []>} : vector<8x8xbf16>, vector<8x8xbf16>, vector<8x8xf32> -> vector<8x8xf32>
    %cst_32 = arith.constant -1.000000e+30 : f32
    %90 = vector.broadcast %cst_32 : f32 to vector<8x8xf32>
    %91 = arith.select %40, %89, %90 : vector<8x8xi1>, vector<8x8xf32>
    %cst_33 = arith.constant dense<0xFF800000> : vector<8xf32>
    %92 = vector.multi_reduction <maximumf>, %91, %cst_33 [1] : vector<8x8xf32> to vector<8xf32>
    %93 = vector.shape_cast %92 : vector<8xf32> to vector<8x1xf32>
    %94 = vector.broadcast %93 : vector<8x1xf32> to vector<8x8xf32>
    %95 = arith.subf %91, %94 : vector<8x8xf32>
    %96 = math.exp %95 : vector<8x8xf32>
    %cst_34 = arith.constant dense<0.000000e+00> : vector<8xf32>
    %97 = vector.multi_reduction <add>, %96, %cst_34 [1] : vector<8x8xf32> to vector<8xf32>
    %98 = vector.shape_cast %97 : vector<8xf32> to vector<8x1xf32>
    %99 = tpu.reciprocal %98 {approx = true} : vector<8x1xf32> -> vector<8x1xf32>
    %100 = vector.broadcast %99 : vector<8x1xf32> to vector<8x8xf32>
    %101 = arith.mulf %96, %100 : vector<8x8xf32>
    %102 = arith.truncf %101 : vector<8x8xf32> to vector<8x8xbf16>
    %cst_35 = arith.constant dense<0.000000e+00> : vector<8x8xf32>
    %103 = tpu.matmul %102, %88, %cst_35 {dimension_numbers = #tpu.dot_dimension_numbers<[1], [0], [0], [1], [0, 0, 1, 1], [], []>} : vector<8x8xbf16>, vector<8x8xbf16>, vector<8x8xf32> -> vector<8x8xf32>
    %104 = arith.truncf %103 : vector<8x8xf32> to vector<8x8xbf16>
    %c16 = arith.constant 16 : index
    %c0_36 = arith.constant 0 : index
    %105 = vector.load %arg6[%c16, %c0_36] : memref<32x32xbf16, #tpu.memory_space<vmem>>, vector<8x32xbf16>
    %cst_37 = arith.constant dense<0.000000e+00> : vector<8x32xf32>
    %106 = tpu.matmul %104, %105, %cst_37 {dimension_numbers = #tpu.dot_dimension_numbers<[1], [0], [0], [1], [0, 0, 1, 1], [], []>} : vector<8x8xbf16>, vector<8x32xbf16>, vector<8x32xf32> -> vector<8x32xf32>
    %107 = arith.addf %85, %106 : vector<8x32xf32>
    %108 = vector.extract_strided_slice %33 {offsets = [0, 24], sizes = [8, 8], strides = [1, 1]} : vector<8x32xbf16> to vector<8x8xbf16>
    %109 = vector.extract_strided_slice %35 {offsets = [0, 24], sizes = [8, 8], strides = [1, 1]} : vector<8x32xbf16> to vector<8x8xbf16>
    %110 = vector.extract_strided_slice %37 {offsets = [0, 24], sizes = [8, 8], strides = [1, 1]} : vector<8x32xbf16> to vector<8x8xbf16>
    %cst_38 = arith.constant dense<0.000000e+00> : vector<8x8xf32>
    %111 = tpu.matmul %108, %109, %cst_38 {dimension_numbers = #tpu.dot_dimension_numbers<[1], [1], [0], [0], [0, 0, 1, 0], [], []>} : vector<8x8xbf16>, vector<8x8xbf16>, vector<8x8xf32> -> vector<8x8xf32>
    %cst_39 = arith.constant -1.000000e+30 : f32
    %112 = vector.broadcast %cst_39 : f32 to vector<8x8xf32>
    %113 = arith.select %40, %111, %112 : vector<8x8xi1>, vector<8x8xf32>
    %cst_40 = arith.constant dense<0xFF800000> : vector<8xf32>
    %114 = vector.multi_reduction <maximumf>, %113, %cst_40 [1] : vector<8x8xf32> to vector<8xf32>
    %115 = vector.shape_cast %114 : vector<8xf32> to vector<8x1xf32>
    %116 = vector.broadcast %115 : vector<8x1xf32> to vector<8x8xf32>
    %117 = arith.subf %113, %116 : vector<8x8xf32>
    %118 = math.exp %117 : vector<8x8xf32>
    %cst_41 = arith.constant dense<0.000000e+00> : vector<8xf32>
    %119 = vector.multi_reduction <add>, %118, %cst_41 [1] : vector<8x8xf32> to vector<8xf32>
    %120 = vector.shape_cast %119 : vector<8xf32> to vector<8x1xf32>
    %121 = tpu.reciprocal %120 {approx = true} : vector<8x1xf32> -> vector<8x1xf32>
    %122 = vector.broadcast %121 : vector<8x1xf32> to vector<8x8xf32>
    %123 = arith.mulf %118, %122 : vector<8x8xf32>
    %124 = arith.truncf %123 : vector<8x8xf32> to vector<8x8xbf16>
    %cst_42 = arith.constant dense<0.000000e+00> : vector<8x8xf32>
    %125 = tpu.matmul %124, %110, %cst_42 {dimension_numbers = #tpu.dot_dimension_numbers<[1], [0], [0], [1], [0, 0, 1, 1], [], []>} : vector<8x8xbf16>, vector<8x8xbf16>, vector<8x8xf32> -> vector<8x8xf32>
    %126 = arith.truncf %125 : vector<8x8xf32> to vector<8x8xbf16>
    %c24 = arith.constant 24 : index
    %c0_43 = arith.constant 0 : index
    %127 = vector.load %arg6[%c24, %c0_43] : memref<32x32xbf16, #tpu.memory_space<vmem>>, vector<8x32xbf16>
    %cst_44 = arith.constant dense<0.000000e+00> : vector<8x32xf32>
    %128 = tpu.matmul %126, %127, %cst_44 {dimension_numbers = #tpu.dot_dimension_numbers<[1], [0], [0], [1], [0, 0, 1, 1], [], []>} : vector<8x8xbf16>, vector<8x32xbf16>, vector<8x32xf32> -> vector<8x32xf32>
    %129 = arith.addf %107, %128 : vector<8x32xf32>
    %130 = arith.addf %1, %129 : vector<8x32xf32>
    %c0_45 = arith.constant 0 : index
    %c0_46 = arith.constant 0 : index
    %131 = vector.load %arg7[%c0_45, %c0_46] : memref<1x32xf32, #tpu.memory_space<vmem>>, vector<1x32xf32>
    %132 = vector.broadcast %131 : vector<1x32xf32> to vector<8x32xf32>
    %133 = arith.addf %130, %132 : vector<8x32xf32>
    %c0_47 = arith.constant 0 : index
    %c0_48 = arith.constant 0 : index
    %134 = vector.load %arg8[%c0_47, %c0_48] : memref<1x32xf32, #tpu.memory_space<vmem>>, vector<1x32xf32>
    %c0_49 = arith.constant 0 : index
    %c0_50 = arith.constant 0 : index
    %135 = vector.load %arg9[%c0_49, %c0_50] : memref<1x32xf32, #tpu.memory_space<vmem>>, vector<1x32xf32>
    %cst_51 = arith.constant dense<0.000000e+00> : vector<8xf32>
    %136 = vector.multi_reduction <add>, %133, %cst_51 [1] : vector<8x32xf32> to vector<8xf32>
    %137 = vector.shape_cast %136 : vector<8xf32> to vector<8x1xf32>
    %cst_52 = arith.constant 3.200000e+01 : f32
    %138 = vector.broadcast %cst_52 : f32 to vector<8x1xf32>
    %139 = arith.divf %137, %138 : vector<8x1xf32>
    %140 = vector.broadcast %139 : vector<8x1xf32> to vector<8x32xf32>
    %141 = arith.subf %133, %140 : vector<8x32xf32>
    %142 = arith.mulf %141, %141 : vector<8x32xf32>
    %cst_53 = arith.constant dense<0.000000e+00> : vector<8xf32>
    %143 = vector.multi_reduction <add>, %142, %cst_53 [1] : vector<8x32xf32> to vector<8xf32>
    %144 = vector.shape_cast %143 : vector<8xf32> to vector<8x1xf32>
    %cst_54 = arith.constant 3.200000e+01 : f32
    %145 = vector.broadcast %cst_54 : f32 to vector<8x1xf32>
    %146 = arith.divf %144, %145 : vector<8x1xf32>
    %147 = vector.broadcast %139 : vector<8x1xf32> to vector<8x32xf32>
    %148 = arith.subf %133, %147 : vector<8x32xf32>
    %cst_55 = arith.constant 9.99999974E-6 : f32
    %149 = vector.broadcast %cst_55 : f32 to vector<8x1xf32>
    %150 = arith.addf %146, %149 : vector<8x1xf32>
    %151 = math.rsqrt %150 : vector<8x1xf32>
    %152 = vector.broadcast %151 : vector<8x1xf32> to vector<8x32xf32>
    %153 = arith.mulf %148, %152 : vector<8x32xf32>
    %154 = vector.broadcast %134 : vector<1x32xf32> to vector<8x32xf32>
    %155 = arith.mulf %153, %154 : vector<8x32xf32>
    %156 = vector.broadcast %135 : vector<1x32xf32> to vector<8x32xf32>
    %157 = arith.addf %155, %156 : vector<8x32xf32>
    %158 = arith.truncf %157 : vector<8x32xf32> to vector<8x32xbf16>
    %cst_56 = arith.constant 0.000000e+00 : f32
    %159 = vector.broadcast %cst_56 : f32 to vector<8x32xf32>
    %c0_57 = arith.constant 0 : index
    %c0_58 = arith.constant 0 : index
    %160 = vector.load %arg10[%c0_57, %c0_58] : memref<32x128xbf16, #tpu.memory_space<vmem>>, vector<32x128xbf16>
    %cst_59 = arith.constant dense<0.000000e+00> : vector<8x128xf32>
    %161 = tpu.matmul %158, %160, %cst_59 {dimension_numbers = #tpu.dot_dimension_numbers<[1], [0], [0], [1], [0, 0, 1, 1], [], []>} : vector<8x32xbf16>, vector<32x128xbf16>, vector<8x128xf32> -> vector<8x128xf32>
    %c0_60 = arith.constant 0 : index
    %c0_61 = arith.constant 0 : index
    %162 = vector.load %arg11[%c0_60, %c0_61] : memref<1x128xf32, #tpu.memory_space<vmem>>, vector<1x128xf32>
    %163 = vector.broadcast %162 : vector<1x128xf32> to vector<8x128xf32>
    %164 = arith.addf %161, %163 : vector<8x128xf32>
    %cst_62 = arith.constant 0.000000e+00 : f32
    %165 = vector.broadcast %cst_62 : f32 to vector<8x128xf32>
    %166 = arith.cmpf oge, %164, %165 : vector<8x128xf32>
    %cst_63 = arith.constant 0.00999999977 : f32
    %167 = vector.broadcast %cst_63 : f32 to vector<8x128xf32>
    %168 = arith.mulf %167, %164 : vector<8x128xf32>
    %169 = arith.select %166, %164, %168 : vector<8x128xi1>, vector<8x128xf32>
    %170 = arith.truncf %169 : vector<8x128xf32> to vector<8x128xbf16>
    %c0_64 = arith.constant 0 : index
    %c0_65 = arith.constant 0 : index
    %171 = vector.load %arg12[%c0_64, %c0_65] : memref<128x32xbf16, #tpu.memory_space<vmem>>, vector<128x32xbf16>
    %cst_66 = arith.constant dense<0.000000e+00> : vector<8x32xf32>
    %172 = tpu.matmul %170, %171, %cst_66 {dimension_numbers = #tpu.dot_dimension_numbers<[1], [0], [0], [1], [0, 0, 1, 1], [], []>} : vector<8x128xbf16>, vector<128x32xbf16>, vector<8x32xf32> -> vector<8x32xf32>
    %173 = arith.addf %159, %172 : vector<8x32xf32>
    %174 = arith.addf %133, %173 : vector<8x32xf32>
    %c0_67 = arith.constant 0 : index
    %c0_68 = arith.constant 0 : index
    %175 = vector.load %arg13[%c0_67, %c0_68] : memref<1x32xf32, #tpu.memory_space<vmem>>, vector<1x32xf32>
    %176 = vector.broadcast %175 : vector<1x32xf32> to vector<8x32xf32>
    %177 = arith.addf %174, %176 : vector<8x32xf32>
    %c0_69 = arith.constant 0 : index
    %c0_70 = arith.constant 0 : index
    %c0_71 = arith.constant 0 : index
    %178 = vector.load %arg14[%c0_69, %c0_70, %c0_71] : memref<1x8x32xf32, #tpu.memory_space<vmem>>, vector<1x8x32xf32>
    %179 = vector.shape_cast %178 : vector<1x8x32xf32> to vector<8x32xf32>
    %180 = vector.shape_cast %177 : vector<8x32xf32> to vector<1x8x32xf32>
    tpu.vector_store %arg14[%c0_69, %c0_70, %c0_71], %180 {strides = array<i32>} : memref<1x8x32xf32, #tpu.memory_space<vmem>>, vector<1x8x32xf32>,
    return
  }
  func.func @transform_0(%arg0: i32) -> (i32, i32, i32) {
    %c0_i32 = arith.constant 0 : i32
    %c0_i32_0 = arith.constant 0 : i32
    %c0_i32_1 = arith.constant 0 : i32
    return %arg0, %c0_i32, %c0_i32_0 : i32, i32, i32
  }
  func.func @transform_1(%arg0: i32) -> (i32, i32) {
    %c0_i32 = arith.constant 0 : i32
    %c0_i32_0 = arith.constant 0 : i32
    %c0_i32_1 = arith.constant 0 : i32
    return %c0_i32, %c0_i32_0 : i32, i32
  }
  func.func @transform_2(%arg0: i32) -> (i32, i32) {
    %c0_i32 = arith.constant 0 : i32
    %c0_i32_0 = arith.constant 0 : i32
    %c0_i32_1 = arith.constant 0 : i32
    return %c0_i32, %c0_i32_0 : i32, i32
  }
  func.func @transform_3(%arg0: i32) -> (i32, i32) {
    %c0_i32 = arith.constant 0 : i32
    %c0_i32_0 = arith.constant 0 : i32
    %c0_i32_1 = arith.constant 0 : i32
    return %c0_i32, %c0_i32_0 : i32, i32
  }
  func.func @transform_4(%arg0: i32) -> (i32, i32) {
    %c0_i32 = arith.constant 0 : i32
    %c0_i32_0 = arith.constant 0 : i32
    %c0_i32_1 = arith.constant 0 : i32
    return %c0_i32, %c0_i32_0 : i32, i32
  }
  func.func @transform_5(%arg0: i32) -> (i32, i32) {
    %c0_i32 = arith.constant 0 : i32
    %c0_i32_0 = arith.constant 0 : i32
    %c0_i32_1 = arith.constant 0 : i32
    return %c0_i32, %c0_i32_0 : i32, i32
  }
  func.func @transform_6(%arg0: i32) -> (i32, i32) {
    %c0_i32 = arith.constant 0 : i32
    %c0_i32_0 = arith.constant 0 : i32
    %c0_i32_1 = arith.constant 0 : i32
    return %c0_i32, %c0_i32_0 : i32, i32
  }
  func.func @transform_7(%arg0: i32) -> (i32, i32) {
    %c0_i32 = arith.constant 0 : i32
    %c0_i32_0 = arith.constant 0 : i32
    %c0_i32_1 = arith.constant 0 : i32
    return %c0_i32, %c0_i32_0 : i32, i32
  }
  func.func @transform_8(%arg0: i32) -> (i32, i32) {
    %c0_i32 = arith.constant 0 : i32
    %c0_i32_0 = arith.constant 0 : i32
    %c0_i32_1 = arith.constant 0 : i32
    return %c0_i32, %c0_i32_0 : i32, i32
  }
  func.func @transform_9(%arg0: i32) -> (i32, i32) {
    %c0_i32 = arith.constant 0 : i32
    %c0_i32_0 = arith.constant 0 : i32
    %c0_i32_1 = arith.constant 0 : i32
    return %c0_i32, %c0_i32_0 : i32, i32
  }
  func.func @transform_10(%arg0: i32) -> (i32, i32) {
    %c0_i32 = arith.constant 0 : i32
    %c0_i32_0 = arith.constant 0 : i32
    %c0_i32_1 = arith.constant 0 : i32
    return %c0_i32, %c0_i32_0 : i32, i32
  }
  func.func @transform_11(%arg0: i32) -> (i32, i32) {
    %c0_i32 = arith.constant 0 : i32
    %c0_i32_0 = arith.constant 0 : i32
    %c0_i32_1 = arith.constant 0 : i32
    return %c0_i32, %c0_i32_0 : i32, i32
  }
  func.func @transform_12(%arg0: i32) -> (i32, i32) {
    %c0_i32 = arith.constant 0 : i32
    %c0_i32_0 = arith.constant 0 : i32
    %c0_i32_1 = arith.constant 0 : i32
    return %c0_i32, %c0_i32_0 : i32, i32
  }
  func.func @transform_13(%arg0: i32) -> (i32, i32, i32) {
    %c0_i32 = arith.constant 0 : i32
    %c0_i32_0 = arith.constant 0 : i32
    %c0_i32_1 = arith.constant 0 : i32
    return %arg0, %c0_i32, %c0_i32_0 : i32, i32, i32
  }
}

</mosaic_0001>

<llo_original>
// kernel: tpu_custom_call.1
$region0: #{tpu_custom_call.1}
  #allocation0 [shape = 'u32[]', space=smem, size = 0x4, offset = 0x4, fixed_abs, tag = 'smem constant byte address 0x4 - core index']
  #allocation1 [shape = 'u32[144,128]{1,0:T(1,128)}', space=vmem, size = 0x12000, scoped, tag = 'internal scratch']
  %s0 = inlined_call_operand.vmem [shape: f32[2,8,32], index: 0, kind: input, shape index: {}]
  %s1 = inlined_call_operand.vmem [shape: f32[1,32], index: 1, kind: input, shape index: {}]
  %s2 = inlined_call_operand.vmem [shape: f32[1,32], index: 2, kind: input, shape index: {}]
  %s3 = inlined_call_operand.vmem [shape: bf16[32,96], index: 3, kind: input, shape index: {}]
  %s4 = inlined_call_operand.vmem [shape: f32[1,96], index: 4, kind: input, shape index: {}]
  %s5 = inlined_call_operand.vmem [shape: bf16[32,32], index: 5, kind: input, shape index: {}]
  %s6 = inlined_call_operand.vmem [shape: f32[1,32], index: 6, kind: input, shape index: {}]
  %s7 = inlined_call_operand.vmem [shape: f32[1,32], index: 7, kind: input, shape index: {}]
  %s8 = inlined_call_operand.vmem [shape: f32[1,32], index: 8, kind: input, shape index: {}]
  %s9 = inlined_call_operand.vmem [shape: bf16[32,128], index: 9, kind: input, shape index: {}]
  %s10 = inlined_call_operand.vmem [shape: f32[1,128], index: 10, kind: input, shape index: {}]
  %s11 = inlined_call_operand.vmem [shape: bf16[128,32], index: 11, kind: input, shape index: {}]
  %s12 = inlined_call_operand.vmem [shape: f32[1,32], index: 12, kind: input, shape index: {}]
  %s13 = inlined_call_operand.hbm [shape: f32[2,8,32], index: 13, kind: output, shape index: {}]
  %s14 = sld [smem:[#allocation0]]
  $region85: #{tpu_custom_call.1} parent=0
    _
  %s16 = ssub.s32 1, %s14
  %s17 = scalar_select 0, %s16, %s14
  $region1: #{tpu_custom_call.1} parent=0
    #allocation2 [shape = 'u8[8192]{0}', space=vmem, size = 0x2000, scoped, tag = 'output window, operand 0']
    #allocation3 [shape = 's32[2]{0}', space=sflag, size = 0x8, scoped, tag = 'scoped memory for tpu_custom_call.1']
    %18 = vsyncpa [#allocation3], 0
    %s19 = scalar_lea.sflag [#allocation3], 1
    %20 = vsyncpa %s19, 0
    loop: start=0, step=1, limit=4
    $region2: #{tpu_custom_call.1} parent=1 // loop_pre_header
      _
    $region3: #{tpu_custom_call.1} parent=1 // loop_header
      %s22 = sphi 0, %s26
      %p23 = scmp.ge.s32.totalorder %s22, 4
      %s32 = sphi 0, %s34
      %s35 = sphi 0, %s32
      %s36 = sphi 0, %s35
      %s52 = sphi 0, %s36
      %s56 = sphi 0, %s56
      %s58 = sphi 0, %s56
      %s59 = sphi 0, %s58
      %s73 = sphi 0, %s59
      %s77 = sphi 0, %s77
      %s79 = sphi 0, %s77
      %s80 = sphi 0, %s79
      %s94 = sphi 0, %s80
      %s98 = sphi 0, %s98
      %s100 = sphi 0, %s98
      %s101 = sphi 0, %s100
      %s115 = sphi 0, %s101
      %s119 = sphi 0, %s119
      %s121 = sphi 0, %s119
      %s122 = sphi 0, %s121
      %s136 = sphi 0, %s122
      %s140 = sphi 0, %s140
      %s142 = sphi 0, %s140
      %s143 = sphi 0, %s142
      %s157 = sphi 0, %s143
      %s161 = sphi 0, %s161
      %s163 = sphi 0, %s161
      %s164 = sphi 0, %s163
      %s178 = sphi 0, %s164
      %s182 = sphi 0, %s182
      %s184 = sphi 0, %s182
      %s185 = sphi 0, %s184
      %s199 = sphi 0, %s185
      %s203 = sphi 0, %s203
      %s205 = sphi 0, %s203
      %s206 = sphi 0, %s205
      %s220 = sphi 0, %s206
      %s224 = sphi 0, %s224
      %s226 = sphi 0, %s224
      %s227 = sphi 0, %s226
      %s241 = sphi 0, %s227
      %s245 = sphi 0, %s245
      %s247 = sphi 0, %s245
      %s248 = sphi 0, %s247
      %s262 = sphi 0, %s248
      %s266 = sphi 0, %s266
      %s268 = sphi 0, %s266
      %s269 = sphi 0, %s268
      %s283 = sphi 0, %s269
      %s287 = sphi 0, %s287
      %s289 = sphi 0, %s287
      %s290 = sphi 0, %s289
      %s304 = sphi 0, %s290
      %s310 = sphi 0, %s312
      %s313 = sphi 0, %s310
      %s314 = sphi 0, %s313
      %s330 = sphi 0, %s314
    $region4: #{tpu_custom_call.1} parent=1 // loop_header_branch
      %25 = sbr.rel (%p23) target = $region8
    $region5: #{tpu_custom_call.1} parent=1 // loop_body
      %s27 = ssub.s32 %s22, 1
      %s28 = ssub.s32 %s22, 2
      %s29 = sadd.s32 %s22, 1
      %s30 = ssub.s32 %s22, %s29
      %p31 = scmp.eq.s32.totalorder %s30, 0
      %s33 = sadd.s32 %s32, 1
      %s34 = scalar_select %p31, %s32, %s33
      %p37 = pneg %p31
      %p38 = scmp.eq.s32.totalorder %s22, 1
      %p39 = por %p37, %p38
      %p40 = scmp.ne.s32.totalorder %s32, %s35
      %p41 = scmp.eq.s32.totalorder %s22, 0
      %p42 = por %p40, %p41
      %p43 = scmp.ne.s32.totalorder %s32, %s35
      %p44 = scmp.eq.s32.totalorder %s27, 1
      %p45 = por %p43, %p44
      %p46 = scmp.ne.s32.totalorder %s35, %s36
      %p47 = scmp.eq.s32.totalorder %s27, 0
      %p48 = por %p46, %p47
      %p49 = scmp.ne.s32.totalorder %s35, %s36
      %p50 = scmp.eq.s32.totalorder %s28, 1
      %p51 = por %p49, %p50
      %p53 = scmp.ne.s32.totalorder %s36, %s52
      %p54 = scmp.eq.s32.totalorder %s28, 0
      %p55 = por %p53, %p54
      %s57 = sadd.s32 %s56, 1
      %p60 = scmp.eq.s32.totalorder %s22, 1
      %p61 = scmp.ne.s32.totalorder %s56, %s58
      %p62 = scmp.eq.s32.totalorder %s22, 0
      %p63 = por %p61, %p62
      %p64 = scmp.ne.s32.totalorder %s56, %s58
      %p65 = scmp.eq.s32.totalorder %s27, 1
      %p66 = por %p64, %p65
      %p67 = scmp.ne.s32.totalorder %s58, %s59
      %p68 = scmp.eq.s32.totalorder %s27, 0
      %p69 = por %p67, %p68
      %p70 = scmp.ne.s32.totalorder %s58, %s59
      %p71 = scmp.eq.s32.totalorder %s28, 1
      %p72 = por %p70, %p71
      %p74 = scmp.ne.s32.totalorder %s59, %s73
      %p75 = scmp.eq.s32.totalorder %s28, 0
      %p76 = por %p74, %p75
      %s78 = sadd.s32 %s77, 1
      %p81 = scmp.eq.s32.totalorder %s22, 1
      %p82 = scmp.ne.s32.totalorder %s77, %s79
      %p83 = scmp.eq.s32.totalorder %s22, 0
      %p84 = por %p82, %p83
      %p85 = scmp.ne.s32.totalorder %s77, %s79
      %p86 = scmp.eq.s32.totalorder %s27, 1
      %p87 = por %p85, %p86
      %p88 = scmp.ne.s32.totalorder %s79, %s80
      %p89 = scmp.eq.s32.totalorder %s27, 0
      %p90 = por %p88, %p89
      %p91 = scmp.ne.s32.totalorder %s79, %s80
      %p92 = scmp.eq.s32.totalorder %s28, 1
      %p93 = por %p91, %p92
      %p95 = scmp.ne.s32.totalorder %s80, %s94
      %p96 = scmp.eq.s32.totalorder %s28, 0
      %p97 = por %p95, %p96
      %s99 = sadd.s32 %s98, 1
      %p102 = scmp.eq.s32.totalorder %s22, 1
      %p103 = scmp.ne.s32.totalorder %s98, %s100
      %p104 = scmp.eq.s32.totalorder %s22, 0
      %p105 = por %p103, %p104
      %p106 = scmp.ne.s32.totalorder %s98, %s100
      %p107 = scmp.eq.s32.totalorder %s27, 1
      %p108 = por %p106, %p107
      %p109 = scmp.ne.s32.totalorder %s100, %s101
      %p110 = scmp.eq.s32.totalorder %s27, 0
      %p111 = por %p109, %p110
      %p112 = scmp.ne.s32.totalorder %s100, %s101
      %p113 = scmp.eq.s32.totalorder %s28, 1
      %p114 = por %p112, %p113
      %p116 = scmp.ne.s32.totalorder %s101, %s115
      %p117 = scmp.eq.s32.totalorder %s28, 0
      %p118 = por %p116, %p117
      %s120 = sadd.s32 %s119, 1
      %p123 = scmp.eq.s32.totalorder %s22, 1
      %p124 = scmp.ne.s32.totalorder %s119, %s121
      %p125 = scmp.eq.s32.totalorder %s22, 0
      %p126 = por %p124, %p125
      %p127 = scmp.ne.s32.totalorder %s119, %s121
      %p128 = scmp.eq.s32.totalorder %s27, 1
      %p129 = por %p127, %p128
      %p130 = scmp.ne.s32.totalorder %s121, %s122
      %p131 = scmp.eq.s32.totalorder %s27, 0
      %p132 = por %p130, %p131
      %p133 = scmp.ne.s32.totalorder %s121, %s122
      %p134 = scmp.eq.s32.totalorder %s28, 1
      %p135 = por %p133, %p134
      %p137 = scmp.ne.s32.totalorder %s122, %s136
      %p138 = scmp.eq.s32.totalorder %s28, 0
      %p139 = por %p137, %p138
      %s141 = sadd.s32 %s140, 1
      %p144 = scmp.eq.s32.totalorder %s22, 1
      %p145 = scmp.ne.s32.totalorder %s140, %s142
      %p146 = scmp.eq.s32.totalorder %s22, 0
      %p147 = por %p145, %p146
      %p148 = scmp.ne.s32.totalorder %s140, %s142
      %p149 = scmp.eq.s32.totalorder %s27, 1
      %p150 = por %p148, %p149
      %p151 = scmp.ne.s32.totalorder %s142, %s143
      %p152 = scmp.eq.s32.totalorder %s27, 0
      %p153 = por %p151, %p152
      %p154 = scmp.ne.s32.totalorder %s142, %s143
      %p155 = scmp.eq.s32.totalorder %s28, 1
      %p156 = por %p154, %p155
      %p158 = scmp.ne.s32.totalorder %s143, %s157
      %p159 = scmp.eq.s32.totalorder %s28, 0
      %p160 = por %p158, %p159
      %s162 = sadd.s32 %s161, 1
      %p165 = scmp.eq.s32.totalorder %s22, 1
      %p166 = scmp.ne.s32.totalorder %s161, %s163
      %p167 = scmp.eq.s32.totalorder %s22, 0
      %p168 = por %p166, %p167
      %p169 = scmp.ne.s32.totalorder %s161, %s163
      %p170 = scmp.eq.s32.totalorder %s27, 1
      %p171 = por %p169, %p170
      %p172 = scmp.ne.s32.totalorder %s163, %s164
      %p173 = scmp.eq.s32.totalorder %s27, 0
      %p174 = por %p172, %p173
      %p175 = scmp.ne.s32.totalorder %s163, %s164
      %p176 = scmp.eq.s32.totalorder %s28, 1
      %p177 = por %p175, %p176
      %p179 = scmp.ne.s32.totalorder %s164, %s178
      %p180 = scmp.eq.s32.totalorder %s28, 0
      %p181 = por %p179, %p180
      %s183 = sadd.s32 %s182, 1
      %p186 = scmp.eq.s32.totalorder %s22, 1
      %p187 = scmp.ne.s32.totalorder %s182, %s184
      %p188 = scmp.eq.s32.totalorder %s22, 0
      %p189 = por %p187, %p188
      %p190 = scmp.ne.s32.totalorder %s182, %s184
      %p191 = scmp.eq.s32.totalorder %s27, 1
      %p192 = por %p190, %p191
      %p193 = scmp.ne.s32.totalorder %s184, %s185
      %p194 = scmp.eq.s32.totalorder %s27, 0
      %p195 = por %p193, %p194
      %p196 = scmp.ne.s32.totalorder %s184, %s185
      %p197 = scmp.eq.s32.totalorder %s28, 1
      %p198 = por %p196, %p197
      %p200 = scmp.ne.s32.totalorder %s185, %s199
      %p201 = scmp.eq.s32.totalorder %s28, 0
      %p202 = por %p200, %p201
      %s204 = sadd.s32 %s203, 1
      %p207 = scmp.eq.s32.totalorder %s22, 1
      %p208 = scmp.ne.s32.totalorder %s203, %s205
      %p209 = scmp.eq.s32.totalorder %s22, 0
      %p210 = por %p208, %p209
      %p211 = scmp.ne.s32.totalorder %s203, %s205
      %p212 = scmp.eq.s32.totalorder %s27, 1
      %p213 = por %p211, %p212
      %p214 = scmp.ne.s32.totalorder %s205, %s206
      %p215 = scmp.eq.s32.totalorder %s27, 0
      %p216 = por %p214, %p215
      %p217 = scmp.ne.s32.totalorder %s205, %s206
      %p218 = scmp.eq.s32.totalorder %s28, 1
      %p219 = por %p217, %p218
      %p221 = scmp.ne.s32.totalorder %s206, %s220
      %p222 = scmp.eq.s32.totalorder %s28, 0
      %p223 = por %p221, %p222
      %s225 = sadd.s32 %s224, 1
      %p228 = scmp.eq.s32.totalorder %s22, 1
      %p229 = scmp.ne.s32.totalorder %s224, %s226
      %p230 = scmp.eq.s32.totalorder %s22, 0
      %p231 = por %p229, %p230
      %p232 = scmp.ne.s32.totalorder %s224, %s226
      %p233 = scmp.eq.s32.totalorder %s27, 1
      %p234 = por %p232, %p233
      %p235 = scmp.ne.s32.totalorder %s226, %s227
      %p236 = scmp.eq.s32.totalorder %s27, 0
      %p237 = por %p235, %p236
      %p238 = scmp.ne.s32.totalorder %s226, %s227
      %p239 = scmp.eq.s32.totalorder %s28, 1
      %p240 = por %p238, %p239
      %p242 = scmp.ne.s32.totalorder %s227, %s241
      %p243 = scmp.eq.s32.totalorder %s28, 0
      %p244 = por %p242, %p243
      %s246 = sadd.s32 %s245, 1
      %p249 = scmp.eq.s32.totalorder %s22, 1
      %p250 = scmp.ne.s32.totalorder %s245, %s247
      %p251 = scmp.eq.s32.totalorder %s22, 0
      %p252 = por %p250, %p251
      %p253 = scmp.ne.s32.totalorder %s245, %s247
      %p254 = scmp.eq.s32.totalorder %s27, 1
      %p255 = por %p253, %p254
      %p256 = scmp.ne.s32.totalorder %s247, %s248
      %p257 = scmp.eq.s32.totalorder %s27, 0
      %p258 = por %p256, %p257
      %p259 = scmp.ne.s32.totalorder %s247, %s248
      %p260 = scmp.eq.s32.totalorder %s28, 1
      %p261 = por %p259, %p260
      %p263 = scmp.ne.s32.totalorder %s248, %s262
      %p264 = scmp.eq.s32.totalorder %s28, 0
      %p265 = por %p263, %p264
      %s267 = sadd.s32 %s266, 1
      %p270 = scmp.eq.s32.totalorder %s22, 1
      %p271 = scmp.ne.s32.totalorder %s266, %s268
      %p272 = scmp.eq.s32.totalorder %s22, 0
      %p273 = por %p271, %p272
      %p274 = scmp.ne.s32.totalorder %s266, %s268
      %p275 = scmp.eq.s32.totalorder %s27, 1
      %p276 = por %p274, %p275
      %p277 = scmp.ne.s32.totalorder %s268, %s269
      %p278 = scmp.eq.s32.totalorder %s27, 0
      %p279 = por %p277, %p278
      %p280 = scmp.ne.s32.totalorder %s268, %s269
      %p281 = scmp.eq.s32.totalorder %s28, 1
      %p282 = por %p280, %p281
      %p284 = scmp.ne.s32.totalorder %s269, %s283
      %p285 = scmp.eq.s32.totalorder %s28, 0
      %p286 = por %p284, %p285
      %s288 = sadd.s32 %s287, 1
      %p291 = scmp.eq.s32.totalorder %s22, 1
      %p292 = scmp.ne.s32.totalorder %s287, %s289
      %p293 = scmp.eq.s32.totalorder %s22, 0
      %p294 = por %p292, %p293
      %p295 = scmp.ne.s32.totalorder %s287, %s289
      %p296 = scmp.eq.s32.totalorder %s27, 1
      %p297 = por %p295, %p296
      %p298 = scmp.ne.s32.totalorder %s289, %s290
      %p299 = scmp.eq.s32.totalorder %s27, 0
      %p300 = por %p298, %p299
      %p301 = scmp.ne.s32.totalorder %s289, %s290
      %p302 = scmp.eq.s32.totalorder %s28, 1
      %p303 = por %p301, %p302
      %p305 = scmp.ne.s32.totalorder %s290, %s304
      %p306 = scmp.eq.s32.totalorder %s28, 0
      %p307 = por %p305, %p306
      %s308 = ssub.s32 %s22, %s29
      %p309 = scmp.eq.s32.totalorder %s308, 0
      %s311 = sadd.s32 %s310, 1
      %s312 = scalar_select %p309, %s310, %s311
      %p315 = pneg %p309
      %p316 = scmp.eq.s32.totalorder %s22, 1
      %p317 = por %p315, %p316
      %p318 = scmp.ne.s32.totalorder %s310, %s313
      %p319 = scmp.eq.s32.totalorder %s22, 0
      %p320 = por %p318, %p319
      %p321 = scmp.ne.s32.totalorder %s310, %s313
      %p322 = scmp.eq.s32.totalorder %s27, 1
      %p323 = por %p321, %p322
      %p324 = scmp.ne.s32.totalorder %s313, %s314
      %p325 = scmp.eq.s32.totalorder %s27, 0
      %p326 = por %p324, %p325
      %p327 = scmp.ne.s32.totalorder %s313, %s314
      %p328 = scmp.eq.s32.totalorder %s28, 1
      %p329 = por %p327, %p328
      %p331 = scmp.ne.s32.totalorder %s314, %s330
      %p332 = scmp.eq.s32.totalorder %s28, 0
      %p333 = por %p331, %p332
      %p334 = scmp.le.s32.totalorder 1, %s22
      %p335 = scmp.lt.s32.totalorder %s22, 3
      %p336 = pnand %p334, %p335
      %p337 = pneg %p336
      // Predicated region
      $region9: #{tpu_custom_call.1} parent=5 // pred_check
        _
      $region10: #{tpu_custom_call.1} parent=5 // pred_check_branch
        %339 = sbr.rel (%p336) target = $region12
      $region11: #{tpu_custom_call.1} parent=5 // pred_region
        %s340 = ssub.s32 %s22, 1
        // Predicated region
        $region13: #{tpu_custom_call.1} parent=11 // pred_check
          %p341 = pneg %p69
        $region14: #{tpu_custom_call.1} parent=11 // pred_check_branch
          %343 = sbr.rel (%p341) target = $region16
        $region15: #{tpu_custom_call.1} parent=11 // pred_region
          _
        $region16: #{tpu_custom_call.1} parent=11 // pred_fallthru
          _
        // Predicated region
        $region17: #{tpu_custom_call.1} parent=11 // pred_check
          %p344 = pneg %p90
        $region18: #{tpu_custom_call.1} parent=11 // pred_check_branch
          %346 = sbr.rel (%p344) target = $region20
        $region19: #{tpu_custom_call.1} parent=11 // pred_region
          _
        $region20: #{tpu_custom_call.1} parent=11 // pred_fallthru
          _
        // Predicated region
        $region21: #{tpu_custom_call.1} parent=11 // pred_check
          %p347 = pneg %p111
        $region22: #{tpu_custom_call.1} parent=11 // pred_check_branch
          %349 = sbr.rel (%p347) target = $region24
        $region23: #{tpu_custom_call.1} parent=11 // pred_region
          _
        $region24: #{tpu_custom_call.1} parent=11 // pred_fallthru
          _
        // Predicated region
        $region25: #{tpu_custom_call.1} parent=11 // pred_check
          %p350 = pneg %p132
        $region26: #{tpu_custom_call.1} parent=11 // pred_check_branch
          %352 = sbr.rel (%p350) target = $region28
        $region27: #{tpu_custom_call.1} parent=11 // pred_region
          _
        $region28: #{tpu_custom_call.1} parent=11 // pred_fallthru
          _
        // Predicated region
        $region29: #{tpu_custom_call.1} parent=11 // pred_check
          %p353 = pneg %p153
        $region30: #{tpu_custom_call.1} parent=11 // pred_check_branch
          %355 = sbr.rel (%p353) target = $region32
        $region31: #{tpu_custom_call.1} parent=11 // pred_region
          _
        $region32: #{tpu_custom_call.1} parent=11 // pred_fallthru
          _
        // Predicated region
        $region33: #{tpu_custom_call.1} parent=11 // pred_check
          %p356 = pneg %p174
        $region34: #{tpu_custom_call.1} parent=11 // pred_check_branch
          %358 = sbr.rel (%p356) target = $region36
        $region35: #{tpu_custom_call.1} parent=11 // pred_region
          _
        $region36: #{tpu_custom_call.1} parent=11 // pred_fallthru
          _
        // Predicated region
        $region37: #{tpu_custom_call.1} parent=11 // pred_check
          %p359 = pneg %p195
        $region38: #{tpu_custom_call.1} parent=11 // pred_check_branch
          %361 = sbr.rel (%p359) target = $region40
        $region39: #{tpu_custom_call.1} parent=11 // pred_region
          _
        $region40: #{tpu_custom_call.1} parent=11 // pred_fallthru
          _
        // Predicated region
        $region41: #{tpu_custom_call.1} parent=11 // pred_check
          %p362 = pneg %p216
        $region42: #{tpu_custom_call.1} parent=11 // pred_check_branch
          %364 = sbr.rel (%p362) target = $region44
        $region43: #{tpu_custom_call.1} parent=11 // pred_region
          _
        $region44: #{tpu_custom_call.1} parent=11 // pred_fallthru
          _
        // Predicated region
        $region45: #{tpu_custom_call.1} parent=11 // pred_check
          %p365 = pneg %p237
        $region46: #{tpu_custom_call.1} parent=11 // pred_check_branch
          %367 = sbr.rel (%p365) target = $region48
        $region47: #{tpu_custom_call.1} parent=11 // pred_region
          _
        $region48: #{tpu_custom_call.1} parent=11 // pred_fallthru
          _
        // Predicated region
        $region49: #{tpu_custom_call.1} parent=11 // pred_check
          %p368 = pneg %p258
        $region50: #{tpu_custom_call.1} parent=11 // pred_check_branch
          %370 = sbr.rel (%p368) target = $region52
        $region51: #{tpu_custom_call.1} parent=11 // pred_region
          _
        $region52: #{tpu_custom_call.1} parent=11 // pred_fallthru
          _
        // Predicated region
        $region53: #{tpu_custom_call.1} parent=11 // pred_check
          %p371 = pneg %p279
        $region54: #{tpu_custom_call.1} parent=11 // pred_check_branch
          %373 = sbr.rel (%p371) target = $region56
        $region55: #{tpu_custom_call.1} parent=11 // pred_region
          _
        $region56: #{tpu_custom_call.1} parent=11 // pred_fallthru
          _
        // Predicated region
        $region57: #{tpu_custom_call.1} parent=11 // pred_check
          %p374 = pneg %p300
        $region58: #{tpu_custom_call.1} parent=11 // pred_check_branch
          %376 = sbr.rel (%p374) target = $region60
        $region59: #{tpu_custom_call.1} parent=11 // pred_region
          _
        $region60: #{tpu_custom_call.1} parent=11 // pred_fallthru
          _
      $region12: #{tpu_custom_call.1} parent=5 // pred_fallthru
        _
      %p377 = scmp.lt.s32.totalorder %s22, 2
      // Predicated region
      $region61: #{tpu_custom_call.1} parent=5 // pred_check
        %p378 = pneg %p377
      $region62: #{tpu_custom_call.1} parent=5 // pred_check_branch
        %380 = sbr.rel (%p378) target = $region64
      $region63: #{tpu_custom_call.1} parent=5 // pred_region
        // Predicated region
        $region65: #{tpu_custom_call.1} parent=63 // pred_check
          %p381 = pneg %p42
        $region66: #{tpu_custom_call.1} parent=63 // pred_check_branch
          %383 = sbr.rel (%p381) target = $region68
        $region67: #{tpu_custom_call.1} parent=63 // pred_region
          %p384 = scmp.lt.s32.totalorder %s22, 1
          %s385 = scalar_select %p384, %s22, 1
          %s386 = smul.addr %s385, 8
          %s387 = scalar_lea.vmem %s0, %s386
        $region68: #{tpu_custom_call.1} parent=63 // pred_fallthru
          _
      $region64: #{tpu_custom_call.1} parent=5 // pred_fallthru
        _
      %p388 = scmp.le.s32.totalorder 1, %s22
      %p389 = scmp.lt.s32.totalorder %s22, 3
      %p390 = pnand %p388, %p389
      %p391 = pneg %p390
      // Predicated region
      $region69: #{tpu_custom_call.1} parent=5 // pred_check
        _
      $region70: #{tpu_custom_call.1} parent=5 // pred_check_branch
        %393 = sbr.rel (%p390) target = $region72
      $region71: #{tpu_custom_call.1} parent=5 // pred_region
        %s394 = ssub.s32 %s22, 1
        %p395 = scmp.lt.s32.totalorder %s27, 1
        %s396 = scalar_select %p395, %s27, 1
        %s397 = smul.addr %s396, 8
        %s398 = scalar_lea.vmem %s0, %s397
        %p399 = pneg %p48
        %p400 = pneg %p45
        %p401 = pneg %p69
        %p402 = pneg %p66
        %p403 = pneg %p90
        %p404 = pneg %p87
        %p405 = pneg %p111
        %p406 = pneg %p108
        %p407 = pneg %p132
        %p408 = pneg %p129
        %p409 = pneg %p153
        %p410 = pneg %p150
        %p411 = pneg %p174
        %p412 = pneg %p171
        %p413 = pneg %p195
        %p414 = pneg %p192
        %p415 = pneg %p216
        %p416 = pneg %p213
        %p417 = pneg %p237
        %p418 = pneg %p234
        %p419 = pneg %p258
        %p420 = pneg %p255
        %p421 = pneg %p279
        %p422 = pneg %p276
        %p423 = pneg %p300
        %p424 = pneg %p297
        %p425 = pneg %p326
        %p426 = pneg %p323
        %s427 = sand.u32 %s313, 1
        %s428 = scalar_lea.sflag [#allocation3], %s427
        %s429 = sand.u32 %s313, 1
        %s430 = smul.addr %s429, 8
        %s431 = scalar_lea.vmem [#allocation2], %s430
        %p432 = scmp.lt.s32.totalorder %s27, 1
        %s433 = scalar_select %p432, %s27, 1
        %s434 = smul.addr %s433, 8
        %s435 = scalar_lea.vmem %s0, %s434
        %v437 = vld [vmem:[%s435] sm:$0xff]
        %v438 = vld [vmem:[%s1] sm:$0x1]
        %v439 = vld [vmem:[%s2] sm:$0x1]
        %vm440 = vcmask 261120
        %v441 = vsel %vm440, %v437, 0.0
        %442 = vadd.xlane.f32.xlu0 %v441
        %v443 = vpop.xlane.xlu0 %442
        %v444 = vrcp.pop 32.0
        %v445 = vmul.f32 %v443, %v444
        %v446 = vsub.f32 %v437, %v445
        %v447 = vmul.f32 %v446, %v446
        %v448 = vsel %vm440, %v447, 0.0
        %449 = vadd.xlane.f32.xlu0 %v448
        %v450 = vpop.xlane.xlu0 %449
        %v451 = vmul.f32 %v450, %v444
        %v452 = vadd.f32 %v451, 1e-05
        %v453 = vrsqrt.pop %v452
        %v454 = vmul.f32 %v446, %v453
        %v456 = vlaneseq
        %v457 = vshrl.u32 %v456, 7
        %v458 = vsub.s32 0, %v457
        %v459 = vrot.slane %v438, %v458
        %v461 = vmul.f32 %v454, %v459
        %v463 = vlaneseq
        %v464 = vshrl.u32 %v463, 7
        %v465 = vsub.s32 0, %v464
        %v466 = vrot.slane %v439, %v465
        %v468 = vadd.f32 %v461, %v466
        %v469 = vpack.c.bf16 %v468, %v468
        %v470 = vld [vmem:[%s3] sm:$0xf]
        %v471 = vld [vmem:[%s3 + $0x4] sm:$0xf]
        %v472 = vld [vmem:[%s3 + $0x8] sm:$0xf]
        %v473 = vld [vmem:[%s3 + $0xc] sm:$0xf]
        %v474 = vld [vmem:[%s4] sm:$0x1]
        %v476 = vlaneseq
        %v477 = vshrl.u32 %v476, 7
        %v478 = vsub.s32 0, %v477
        %v479 = vrot.slane %v474, %v478
        %v485 = vunpack.c.l.b16 %v470
        %v486 = vunpack.c.l.b16 %v471
        %v487 = vunpack.c.l.b16 %v472
        %v488 = vunpack.c.l.b16 %v473
        %v489 = vpack.c.b16 %v486, %v485
        %v490 = vpack.c.b16 %v488, %v487
        %v494 = vsel %vm440, %v469, 0
        %496 = vmatprep.subr.bf16.mxu0 0
        %497 = vmatpush1.bf16.msra.mxu0 0
        %498 = vmatprep.subr.bf16.mxu0 0
        %499 = vmatpush1.bf16.msra.mxu0 0
        %500 = vmatprep.subr.bf16.mxu0 0
        %501 = vmatpush1.bf16.msra.mxu0 0
        %502 = vmatprep.subr.bf16.mxu0 0
        %503 = vmatpush1.bf16.msra.mxu0 0
        %504 = vmatprep.subr.bf16.mxu0 0
        %505 = vmatpush1.bf16.msra.mxu0 0
        %506 = vmatprep.subr.bf16.mxu0 0
        %507 = vmatpush1.bf16.msra.mxu0 0
        %508 = vmatprep.subr.bf16.mxu0 0
        %509 = vmatpush1.bf16.msra.mxu0 %v490
        %510 = vmatprep.subr.bf16.mxu0 0
        %511 = vmatpush1.bf16.msra.mxu0 %v489
        %512 = vmatprep.subr.bf16.mxu0 0
        %513 = vmatpush2.bf16.msra.mxu0 0
        %514 = vmatprep.subr.bf16.mxu0 0
        %515 = vmatpush2.bf16.msra.mxu0 0
        %516 = vmatprep.subr.bf16.mxu0 0
        %517 = vmatpush2.bf16.msra.mxu0 0
        %518 = vmatprep.subr.bf16.mxu0 0
        %519 = vmatpush2.bf16.msra.mxu0 0
        %520 = vmatprep.subr.bf16.mxu0 0
        %521 = vmatpush2.bf16.msra.mxu0 0
        %522 = vmatprep.subr.bf16.mxu0 0
        %523 = vmatpush2.bf16.msra.mxu0 0
        %524 = vmatprep.subr.bf16.mxu0 0
        %525 = vmatpush2.bf16.msra.mxu0 0
        %526 = vmatprep.subr.bf16.mxu0 0
        %527 = vmatpush2.bf16.msra.mxu0 0
        %528 = vmatprep.mubr.bf16.mxu0 0
        %529 = vmatmul.mubr.bf16.gmra.mxu0 %v494
        %v530 = vpop.f32.mrf.mxu0
        %v531 = vadd.f32 %v479, %v530
        %v532 = vpop.f32.mrf.mxu0
        %v533 = vpop.f32.mrf.mxu0
        %v534 = vpop.f32.mrf.mxu0
        %535 = vdwg.mxu0
        %v536 = vpack.c.bf16 %v531, %v531
        %v537 = vlaneseq
        %v538 = vshrl.u32 %v537, 7
        %v539 = vlaneseq
        %v540 = vand.u32 %v539, 127
        %vm541 = vcmp.ge.s32.totalorder %v538, %v540
        %543 = vrot.lane.b32.xlu0 %v536, 96
        %v544 = vpop.permute.xlu0 %543
        %vm545 = vcmask 64512
        %v547 = vsel %vm545, %v536, 0
        %v550 = vsel %vm545, %v544, 0
        %552 = vmatprep.subr.bf16.mxu0 0
        %553 = vmatpush1.bf16.xpose.msra.mxu0 0
        %554 = vmatprep.subr.bf16.mxu0 0
        %555 = vmatpush1.bf16.xpose.msra.mxu0 0
        %556 = vmatprep.subr.bf16.mxu0 0
        %557 = vmatpush1.bf16.xpose.msra.mxu0 0
        %558 = vmatprep.subr.bf16.mxu0 0
        %559 = vmatpush1.bf16.xpose.msra.mxu0 0
        %560 = vmatprep.subr.bf16.mxu0 0
        %561 = vmatpush1.bf16.xpose.msra.mxu0 0
        %562 = vmatprep.subr.bf16.mxu0 0
        %563 = vmatpush1.bf16.xpose.msra.mxu0 0
        %564 = vmatprep.subr.bf16.mxu0 0
        %565 = vmatpush1.bf16.xpose.msra.mxu0 0
        %566 = vmatprep.subr.bf16.mxu0 0
        %567 = vmatpush1.bf16.xpose.msra.mxu0 %v550
        %568 = vmatprep.subr.bf16.mxu0 0
        %569 = vmatpush2.bf16.xpose.msra.mxu0 0
        %570 = vmatprep.subr.bf16.mxu0 0
        %571 = vmatpush2.bf16.xpose.msra.mxu0 0
        %572 = vmatprep.subr.bf16.mxu0 0
        %573 = vmatpush2.bf16.xpose.msra.mxu0 0
        %574 = vmatprep.subr.bf16.mxu0 0
        %575 = vmatpush2.bf16.xpose.msra.mxu0 0
        %576 = vmatprep.subr.bf16.mxu0 0
        %577 = vmatpush2.bf16.xpose.msra.mxu0 0
        %578 = vmatprep.subr.bf16.mxu0 0
        %579 = vmatpush2.bf16.xpose.msra.mxu0 0
        %580 = vmatprep.subr.bf16.mxu0 0
        %581 = vmatpush2.bf16.xpose.msra.mxu0 0
        %582 = vmatprep.subr.bf16.mxu0 0
        %583 = vmatpush2.bf16.xpose.msra.mxu0 0
        %584 = vmatprep.mubr.bf16.mxu0 0
        %585 = vmatmul.mubr.bf16.gmra.mxu0 %v547
        %v586 = vpop.f32.mrf.mxu0
        %v587 = vadd.f32 0.0, %v586
        %v588 = vpop.f32.mrf.mxu0
        %v589 = vpop.f32.mrf.mxu0
        %v590 = vpop.f32.mrf.mxu0
        %591 = vdwg.mxu0
        %v592 = vsel %vm541, %v587, -1e+30
        %v593 = vsel %vm545, %v592, -inf
        %594 = vmax.xlane.f32.xlu0 %v593
        %v595 = vpop.xlane.xlu0 %594
        %v596 = vsub.f32 %v592, %v595
        %v597 = vmul.f32 %v596, 1.442695
        %v598 = vpow.pop %v597
        %v599 = vsel %vm545, %v598, 0.0
        %600 = vadd.xlane.f32.xlu0 %v599
        %v601 = vpop.xlane.xlu0 %600
        %v602 = vrcp.pop %v601
        %v603 = vmul.f32 %v598, %v602
        %v604 = vpack.c.bf16 %v603, %v603
        %605 = vrot.lane.b32.xlu0 %v536, 64
        %v606 = vpop.permute.xlu0 %605
        %v608 = vsel %vm545, %v604, 0
        %vm610 = vcmask 1043456
        %v612 = vsel %vm610, %v606, 0
        %614 = vmatprep.subr.bf16.mxu0 0
        %615 = vmatpush1.bf16.msra.mxu0 0
        %616 = vmatprep.subr.bf16.mxu0 0
        %617 = vmatpush1.bf16.msra.mxu0 0
        %618 = vmatprep.subr.bf16.mxu0 0
        %619 = vmatpush1.bf16.msra.mxu0 0
        %620 = vmatprep.subr.bf16.mxu0 0
        %621 = vmatpush1.bf16.msra.mxu0 0
        %622 = vmatprep.subr.bf16.mxu0 0
        %623 = vmatpush1.bf16.msra.mxu0 0
        %624 = vmatprep.subr.bf16.mxu0 0
        %625 = vmatpush1.bf16.msra.mxu0 0
        %626 = vmatprep.subr.bf16.mxu0 0
        %627 = vmatpush1.bf16.msra.mxu0 0
        %628 = vmatprep.subr.bf16.mxu0 0
        %629 = vmatpush1.bf16.msra.mxu0 %v612
        %630 = vmatprep.subr.bf16.mxu0 0
        %631 = vmatpush2.bf16.msra.mxu0 0
        %632 = vmatprep.subr.bf16.mxu0 0
        %633 = vmatpush2.bf16.msra.mxu0 0
        %634 = vmatprep.subr.bf16.mxu0 0
        %635 = vmatpush2.bf16.msra.mxu0 0
        %636 = vmatprep.subr.bf16.mxu0 0
        %637 = vmatpush2.bf16.msra.mxu0 0
        %638 = vmatprep.subr.bf16.mxu0 0
        %639 = vmatpush2.bf16.msra.mxu0 0
        %640 = vmatprep.subr.bf16.mxu0 0
        %641 = vmatpush2.bf16.msra.mxu0 0
        %642 = vmatprep.subr.bf16.mxu0 0
        %643 = vmatpush2.bf16.msra.mxu0 0
        %644 = vmatprep.subr.bf16.mxu0 0
        %645 = vmatpush2.bf16.msra.mxu0 0
        %646 = vmatprep.mubr.bf16.mxu0 0
        %647 = vmatmul.mubr.bf16.gmra.mxu0 %v608
        %v648 = vpop.f32.mrf.mxu0
        %v649 = vadd.f32 0.0, %v648
        %v650 = vpop.f32.mrf.mxu0
        %v651 = vpop.f32.mrf.mxu0
        %v652 = vpop.f32.mrf.mxu0
        %653 = vdwg.mxu0
        %v654 = vpack.c.bf16 %v649, %v649
        %v655 = vld [vmem:[%s5] sm:$0xf]
        %656 = vrot.lane.b32.xlu0 %v536, 120
        %v657 = vpop.permute.xlu0 %656
        %658 = vrot.lane.b32.xlu0 %v536, 88
        %v659 = vpop.permute.xlu0 %658
        %v661 = vsel %vm545, %v657, 0
        %v664 = vsel %vm545, %v659, 0
        %666 = vmatprep.subr.bf16.mxu0 0
        %667 = vmatpush1.bf16.xpose.msra.mxu0 0
        %668 = vmatprep.subr.bf16.mxu0 0
        %669 = vmatpush1.bf16.xpose.msra.mxu0 0
        %670 = vmatprep.subr.bf16.mxu0 0
        %671 = vmatpush1.bf16.xpose.msra.mxu0 0
        %672 = vmatprep.subr.bf16.mxu0 0
        %673 = vmatpush1.bf16.xpose.msra.mxu0 0
        %674 = vmatprep.subr.bf16.mxu0 0
        %675 = vmatpush1.bf16.xpose.msra.mxu0 0
        %676 = vmatprep.subr.bf16.mxu0 0
        %677 = vmatpush1.bf16.xpose.msra.mxu0 0
        %678 = vmatprep.subr.bf16.mxu0 0
        %679 = vmatpush1.bf16.xpose.msra.mxu0 0
        %680 = vmatprep.subr.bf16.mxu0 0
        %681 = vmatpush1.bf16.xpose.msra.mxu0 %v664
        %682 = vmatprep.subr.bf16.mxu0 0
        %683 = vmatpush2.bf16.xpose.msra.mxu0 0
        %684 = vmatprep.subr.bf16.mxu0 0
        %685 = vmatpush2.bf16.xpose.msra.mxu0 0
        %686 = vmatprep.subr.bf16.mxu0 0
        %687 = vmatpush2.bf16.xpose.msra.mxu0 0
        %688 = vmatprep.subr.bf16.mxu0 0
        %689 = vmatpush2.bf16.xpose.msra.mxu0 0
        %690 = vmatprep.subr.bf16.mxu0 0
        %691 = vmatpush2.bf16.xpose.msra.mxu0 0
        %692 = vmatprep.subr.bf16.mxu0 0
        %693 = vmatpush2.bf16.xpose.msra.mxu0 0
        %694 = vmatprep.subr.bf16.mxu0 0
        %695 = vmatpush2.bf16.xpose.msra.mxu0 0
        %696 = vmatprep.subr.bf16.mxu0 0
        %697 = vmatpush2.bf16.xpose.msra.mxu0 0
        %698 = vmatprep.mubr.bf16.mxu0 0
        %699 = vmatmul.mubr.bf16.gmra.mxu0 %v661
        %v700 = vpop.f32.mrf.mxu0
        %v701 = vadd.f32 0.0, %v700
        %v702 = vpop.f32.mrf.mxu0
        %v703 = vpop.f32.mrf.mxu0
        %v704 = vpop.f32.mrf.mxu0
        %705 = vdwg.mxu0
        %v706 = vsel %vm541, %v701, -1e+30
        %v707 = vsel %vm545, %v706, -inf
        %708 = vmax.xlane.f32.xlu0 %v707
        %v709 = vpop.xlane.xlu0 %708
        %v710 = vsub.f32 %v706, %v709
        %v711 = vmul.f32 %v710, 1.442695
        %v712 = vpow.pop %v711
        %v713 = vsel %vm545, %v712, 0.0
        %714 = vadd.xlane.f32.xlu0 %v713
        %v715 = vpop.xlane.xlu0 %714
        %v716 = vrcp.pop %v715
        %v717 = vmul.f32 %v712, %v716
        %v718 = vpack.c.bf16 %v717, %v717
        %719 = vrot.lane.b32.xlu0 %v536, 56
        %v720 = vpop.permute.xlu0 %719
        %v722 = vsel %vm545, %v718, 0
        %v725 = vsel %vm610, %v720, 0
        %727 = vmatprep.subr.bf16.mxu0 0
        %728 = vmatpush1.bf16.msra.mxu0 0
        %729 = vmatprep.subr.bf16.mxu0 0
        %730 = vmatpush1.bf16.msra.mxu0 0
        %731 = vmatprep.subr.bf16.mxu0 0
        %732 = vmatpush1.bf16.msra.mxu0 0
        %733 = vmatprep.subr.bf16.mxu0 0
        %734 = vmatpush1.bf16.msra.mxu0 0
        %735 = vmatprep.subr.bf16.mxu0 0
        %736 = vmatpush1.bf16.msra.mxu0 0
        %737 = vmatprep.subr.bf16.mxu0 0
        %738 = vmatpush1.bf16.msra.mxu0 0
        %739 = vmatprep.subr.bf16.mxu0 0
        %740 = vmatpush1.bf16.msra.mxu0 0
        %741 = vmatprep.subr.bf16.mxu0 0
        %742 = vmatpush1.bf16.msra.mxu0 %v725
        %743 = vmatprep.subr.bf16.mxu0 0
        %744 = vmatpush2.bf16.msra.mxu0 0
        %745 = vmatprep.subr.bf16.mxu0 0
        %746 = vmatpush2.bf16.msra.mxu0 0
        %747 = vmatprep.subr.bf16.mxu0 0
        %748 = vmatpush2.bf16.msra.mxu0 0
        %749 = vmatprep.subr.bf16.mxu0 0
        %750 = vmatpush2.bf16.msra.mxu0 0
        %751 = vmatprep.subr.bf16.mxu0 0
        %752 = vmatpush2.bf16.msra.mxu0 0
        %753 = vmatprep.subr.bf16.mxu0 0
        %754 = vmatpush2.bf16.msra.mxu0 0
        %755 = vmatprep.subr.bf16.mxu0 0
        %756 = vmatpush2.bf16.msra.mxu0 0
        %757 = vmatprep.subr.bf16.mxu0 0
        %758 = vmatpush2.bf16.msra.mxu0 0
        %759 = vmatprep.mubr.bf16.mxu0 0
        %760 = vmatmul.mubr.bf16.gmra.mxu0 %v722
        %v761 = vpop.f32.mrf.mxu0
        %v762 = vadd.f32 0.0, %v761
        %v763 = vpop.f32.mrf.mxu0
        %v764 = vpop.f32.mrf.mxu0
        %v765 = vpop.f32.mrf.mxu0
        %766 = vdwg.mxu0
        %v767 = vpack.c.bf16 %v762, %v762
        %v768 = vld [vmem:[%s5 + $0x4] sm:$0xf]
        %v770 = vsel %vm545, %v767, 0
        %v773 = vsel %vm610, %v768, 0
        %775 = vmatprep.subr.bf16.mxu0 0
        %776 = vmatpush1.bf16.msra.mxu0 0
        %777 = vmatprep.subr.bf16.mxu0 0
        %778 = vmatpush1.bf16.msra.mxu0 0
        %779 = vmatprep.subr.bf16.mxu0 0
        %780 = vmatpush1.bf16.msra.mxu0 0
        %781 = vmatprep.subr.bf16.mxu0 0
        %782 = vmatpush1.bf16.msra.mxu0 0
        %783 = vmatprep.subr.bf16.mxu0 0
        %784 = vmatpush1.bf16.msra.mxu0 0
        %785 = vmatprep.subr.bf16.mxu0 0
        %786 = vmatpush1.bf16.msra.mxu0 0
        %787 = vmatprep.subr.bf16.mxu0 0
        %788 = vmatpush1.bf16.msra.mxu0 0
        %789 = vmatprep.subr.bf16.mxu0 0
        %790 = vmatpush1.bf16.msra.mxu0 %v773
        %791 = vmatprep.subr.bf16.mxu0 0
        %792 = vmatpush2.bf16.msra.mxu0 0
        %793 = vmatprep.subr.bf16.mxu0 0
        %794 = vmatpush2.bf16.msra.mxu0 0
        %795 = vmatprep.subr.bf16.mxu0 0
        %796 = vmatpush2.bf16.msra.mxu0 0
        %797 = vmatprep.subr.bf16.mxu0 0
        %798 = vmatpush2.bf16.msra.mxu0 0
        %799 = vmatprep.subr.bf16.mxu0 0
        %800 = vmatpush2.bf16.msra.mxu0 0
        %801 = vmatprep.subr.bf16.mxu0 0
        %802 = vmatpush2.bf16.msra.mxu0 0
        %803 = vmatprep.subr.bf16.mxu0 0
        %804 = vmatpush2.bf16.msra.mxu0 0
        %805 = vmatprep.subr.bf16.mxu0 0
        %806 = vmatpush2.bf16.msra.mxu0 0
        %807 = vmatprep.mubr.bf16.mxu0 0
        %808 = vmatmul.mubr.bf16.gmra.mxu0 %v770
        %v809 = vpop.f32.mrf.mxu0
        %v810 = vadd.f32 0.0, %v809
        %v811 = vpop.f32.mrf.mxu0
        %v812 = vpop.f32.mrf.mxu0
        %v813 = vpop.f32.mrf.mxu0
        %814 = vdwg.mxu0
        %v816 = vsel %vm545, %v654, 0
        %v819 = vsel %vm610, %v655, 0
        %821 = vmatprep.subr.bf16.mxu0 0
        %822 = vmatpush1.bf16.msra.mxu0 0
        %823 = vmatprep.subr.bf16.mxu0 0
        %824 = vmatpush1.bf16.msra.mxu0 0
        %825 = vmatprep.subr.bf16.mxu0 0
        %826 = vmatpush1.bf16.msra.mxu0 0
        %827 = vmatprep.subr.bf16.mxu0 0
        %828 = vmatpush1.bf16.msra.mxu0 0
        %829 = vmatprep.subr.bf16.mxu0 0
        %830 = vmatpush1.bf16.msra.mxu0 0
        %831 = vmatprep.subr.bf16.mxu0 0
        %832 = vmatpush1.bf16.msra.mxu0 0
        %833 = vmatprep.subr.bf16.mxu0 0
        %834 = vmatpush1.bf16.msra.mxu0 0
        %835 = vmatprep.subr.bf16.mxu0 0
        %836 = vmatpush1.bf16.msra.mxu0 %v819
        %837 = vmatprep.subr.bf16.mxu0 0
        %838 = vmatpush2.bf16.msra.mxu0 0
        %839 = vmatprep.subr.bf16.mxu0 0
        %840 = vmatpush2.bf16.msra.mxu0 0
        %841 = vmatprep.subr.bf16.mxu0 0
        %842 = vmatpush2.bf16.msra.mxu0 0
        %843 = vmatprep.subr.bf16.mxu0 0
        %844 = vmatpush2.bf16.msra.mxu0 0
        %845 = vmatprep.subr.bf16.mxu0 0
        %846 = vmatpush2.bf16.msra.mxu0 0
        %847 = vmatprep.subr.bf16.mxu0 0
        %848 = vmatpush2.bf16.msra.mxu0 0
        %849 = vmatprep.subr.bf16.mxu0 0
        %850 = vmatpush2.bf16.msra.mxu0 0
        %851 = vmatprep.subr.bf16.mxu0 0
        %852 = vmatpush2.bf16.msra.mxu0 0
        %853 = vmatprep.mubr.bf16.mxu0 0
        %854 = vmatmul.mubr.bf16.gmra.mxu0 %v816
        %v855 = vpop.f32.mrf.mxu0
        %v856 = vadd.f32 %v810, %v855
        %v857 = vpop.f32.mrf.mxu0
        %v858 = vpop.f32.mrf.mxu0
        %v859 = vpop.f32.mrf.mxu0
        %860 = vdwg.mxu0
        %861 = vrot.lane.b32.xlu0 %v536, 112
        %v862 = vpop.permute.xlu0 %861
        %863 = vrot.lane.b32.xlu0 %v536, 80
        %v864 = vpop.permute.xlu0 %863
        %v866 = vsel %vm545, %v862, 0
        %v869 = vsel %vm545, %v864, 0
        %871 = vmatprep.subr.bf16.mxu0 0
        %872 = vmatpush1.bf16.xpose.msra.mxu0 0
        %873 = vmatprep.subr.bf16.mxu0 0
        %874 = vmatpush1.bf16.xpose.msra.mxu0 0
        %875 = vmatprep.subr.bf16.mxu0 0
        %876 = vmatpush1.bf16.xpose.msra.mxu0 0
        %877 = vmatprep.subr.bf16.mxu0 0
        %878 = vmatpush1.bf16.xpose.msra.mxu0 0
        %879 = vmatprep.subr.bf16.mxu0 0
        %880 = vmatpush1.bf16.xpose.msra.mxu0 0
        %881 = vmatprep.subr.bf16.mxu0 0
        %882 = vmatpush1.bf16.xpose.msra.mxu0 0
        %883 = vmatprep.subr.bf16.mxu0 0
        %884 = vmatpush1.bf16.xpose.msra.mxu0 0
        %885 = vmatprep.subr.bf16.mxu0 0
        %886 = vmatpush1.bf16.xpose.msra.mxu0 %v869
        %887 = vmatprep.subr.bf16.mxu0 0
        %888 = vmatpush2.bf16.xpose.msra.mxu0 0
        %889 = vmatprep.subr.bf16.mxu0 0
        %890 = vmatpush2.bf16.xpose.msra.mxu0 0
        %891 = vmatprep.subr.bf16.mxu0 0
        %892 = vmatpush2.bf16.xpose.msra.mxu0 0
        %893 = vmatprep.subr.bf16.mxu0 0
        %894 = vmatpush2.bf16.xpose.msra.mxu0 0
        %895 = vmatprep.subr.bf16.mxu0 0
        %896 = vmatpush2.bf16.xpose.msra.mxu0 0
        %897 = vmatprep.subr.bf16.mxu0 0
        %898 = vmatpush2.bf16.xpose.msra.mxu0 0
        %899 = vmatprep.subr.bf16.mxu0 0
        %900 = vmatpush2.bf16.xpose.msra.mxu0 0
        %901 = vmatprep.subr.bf16.mxu0 0
        %902 = vmatpush2.bf16.xpose.msra.mxu0 0
        %903 = vmatprep.mubr.bf16.mxu0 0
        %904 = vmatmul.mubr.bf16.gmra.mxu0 %v866
        %v905 = vpop.f32.mrf.mxu0
        %v906 = vadd.f32 0.0, %v905
        %v907 = vpop.f32.mrf.mxu0
        %v908 = vpop.f32.mrf.mxu0
        %v909 = vpop.f32.mrf.mxu0
        %910 = vdwg.mxu0
        %v911 = vsel %vm541, %v906, -1e+30
        %v912 = vsel %vm545, %v911, -inf
        %913 = vmax.xlane.f32.xlu0 %v912
        %v914 = vpop.xlane.xlu0 %913
        %v915 = vsub.f32 %v911, %v914
        %v916 = vmul.f32 %v915, 1.442695
        %v917 = vpow.pop %v916
        %v918 = vsel %vm545, %v917, 0.0
        %919 = vadd.xlane.f32.xlu0 %v918
        %v920 = vpop.xlane.xlu0 %919
        %v921 = vrcp.pop %v920
        %v922 = vmul.f32 %v917, %v921
        %v923 = vpack.c.bf16 %v922, %v922
        %924 = vrot.lane.b32.xlu0 %v536, 48
        %v925 = vpop.permute.xlu0 %924
        %v927 = vsel %vm545, %v923, 0
        %v930 = vsel %vm610, %v925, 0
        %932 = vmatprep.subr.bf16.mxu0 0
        %933 = vmatpush1.bf16.msra.mxu0 0
        %934 = vmatprep.subr.bf16.mxu0 0
        %935 = vmatpush1.bf16.msra.mxu0 0
        %936 = vmatprep.subr.bf16.mxu0 0
        %937 = vmatpush1.bf16.msra.mxu0 0
        %938 = vmatprep.subr.bf16.mxu0 0
        %939 = vmatpush1.bf16.msra.mxu0 0
        %940 = vmatprep.subr.bf16.mxu0 0
        %941 = vmatpush1.bf16.msra.mxu0 0
        %942 = vmatprep.subr.bf16.mxu0 0
        %943 = vmatpush1.bf16.msra.mxu0 0
        %944 = vmatprep.subr.bf16.mxu0 0
        %945 = vmatpush1.bf16.msra.mxu0 0
        %946 = vmatprep.subr.bf16.mxu0 0
        %947 = vmatpush1.bf16.msra.mxu0 %v930
        %948 = vmatprep.subr.bf16.mxu0 0
        %949 = vmatpush2.bf16.msra.mxu0 0
        %950 = vmatprep.subr.bf16.mxu0 0
        %951 = vmatpush2.bf16.msra.mxu0 0
        %952 = vmatprep.subr.bf16.mxu0 0
        %953 = vmatpush2.bf16.msra.mxu0 0
        %954 = vmatprep.subr.bf16.mxu0 0
        %955 = vmatpush2.bf16.msra.mxu0 0
        %956 = vmatprep.subr.bf16.mxu0 0
        %957 = vmatpush2.bf16.msra.mxu0 0
        %958 = vmatprep.subr.bf16.mxu0 0
        %959 = vmatpush2.bf16.msra.mxu0 0
        %960 = vmatprep.subr.bf16.mxu0 0
        %961 = vmatpush2.bf16.msra.mxu0 0
        %962 = vmatprep.subr.bf16.mxu0 0
        %963 = vmatpush2.bf16.msra.mxu0 0
        %964 = vmatprep.mubr.bf16.mxu0 0
        %965 = vmatmul.mubr.bf16.gmra.mxu0 %v927
        %v966 = vpop.f32.mrf.mxu0
        %v967 = vadd.f32 0.0, %v966
        %v968 = vpop.f32.mrf.mxu0
        %v969 = vpop.f32.mrf.mxu0
        %v970 = vpop.f32.mrf.mxu0
        %971 = vdwg.mxu0
        %v972 = vpack.c.bf16 %v967, %v967
        %v973 = vld [vmem:[%s5 + $0x8] sm:$0xf]
        %v975 = vsel %vm545, %v972, 0
        %v978 = vsel %vm610, %v973, 0
        %980 = vmatprep.subr.bf16.mxu0 0
        %981 = vmatpush1.bf16.msra.mxu0 0
        %982 = vmatprep.subr.bf16.mxu0 0
        %983 = vmatpush1.bf16.msra.mxu0 0
        %984 = vmatprep.subr.bf16.mxu0 0
        %985 = vmatpush1.bf16.msra.mxu0 0
        %986 = vmatprep.subr.bf16.mxu0 0
        %987 = vmatpush1.bf16.msra.mxu0 0
        %988 = vmatprep.subr.bf16.mxu0 0
        %989 = vmatpush1.bf16.msra.mxu0 0
        %990 = vmatprep.subr.bf16.mxu0 0
        %991 = vmatpush1.bf16.msra.mxu0 0
        %992 = vmatprep.subr.bf16.mxu0 0
        %993 = vmatpush1.bf16.msra.mxu0 0
        %994 = vmatprep.subr.bf16.mxu0 0
        %995 = vmatpush1.bf16.msra.mxu0 %v978
        %996 = vmatprep.subr.bf16.mxu0 0
        %997 = vmatpush2.bf16.msra.mxu0 0
        %998 = vmatprep.subr.bf16.mxu0 0
        %999 = vmatpush2.bf16.msra.mxu0 0
        %1000 = vmatprep.subr.bf16.mxu0 0
        %1001 = vmatpush2.bf16.msra.mxu0 0
        %1002 = vmatprep.subr.bf16.mxu0 0
        %1003 = vmatpush2.bf16.msra.mxu0 0
        %1004 = vmatprep.subr.bf16.mxu0 0
        %1005 = vmatpush2.bf16.msra.mxu0 0
        %1006 = vmatprep.subr.bf16.mxu0 0
        %1007 = vmatpush2.bf16.msra.mxu0 0
        %1008 = vmatprep.subr.bf16.mxu0 0
        %1009 = vmatpush2.bf16.msra.mxu0 0
        %1010 = vmatprep.subr.bf16.mxu0 0
        %1011 = vmatpush2.bf16.msra.mxu0 0
        %1012 = vmatprep.mubr.bf16.mxu0 0
        %1013 = vmatmul.mubr.bf16.gmra.mxu0 %v975
        %v1014 = vpop.f32.mrf.mxu0
        %v1015 = vadd.f32 0.0, %v1014
        %v1016 = vpop.f32.mrf.mxu0
        %v1017 = vpop.f32.mrf.mxu0
        %v1018 = vpop.f32.mrf.mxu0
        %1019 = vdwg.mxu0
        %v1020 = vadd.f32 %v856, %v1015
        %1021 = vrot.lane.b32.xlu0 %v536, 104
        %v1022 = vpop.permute.xlu0 %1021
        %1023 = vrot.lane.b32.xlu0 %v536, 72
        %v1024 = vpop.permute.xlu0 %1023
        %v1026 = vsel %vm545, %v1022, 0
        %v1029 = vsel %vm545, %v1024, 0
        %1031 = vmatprep.subr.bf16.mxu0 0
        %1032 = vmatpush1.bf16.xpose.msra.mxu0 0
        %1033 = vmatprep.subr.bf16.mxu0 0
        %1034 = vmatpush1.bf16.xpose.msra.mxu0 0
        %1035 = vmatprep.subr.bf16.mxu0 0
        %1036 = vmatpush1.bf16.xpose.msra.mxu0 0
        %1037 = vmatprep.subr.bf16.mxu0 0
        %1038 = vmatpush1.bf16.xpose.msra.mxu0 0
        %1039 = vmatprep.subr.bf16.mxu0 0
        %1040 = vmatpush1.bf16.xpose.msra.mxu0 0
        %1041 = vmatprep.subr.bf16.mxu0 0
        %1042 = vmatpush1.bf16.xpose.msra.mxu0 0
        %1043 = vmatprep.subr.bf16.mxu0 0
        %1044 = vmatpush1.bf16.xpose.msra.mxu0 0
        %1045 = vmatprep.subr.bf16.mxu0 0
        %1046 = vmatpush1.bf16.xpose.msra.mxu0 %v1029
        %1047 = vmatprep.subr.bf16.mxu0 0
        %1048 = vmatpush2.bf16.xpose.msra.mxu0 0
        %1049 = vmatprep.subr.bf16.mxu0 0
        %1050 = vmatpush2.bf16.xpose.msra.mxu0 0
        %1051 = vmatprep.subr.bf16.mxu0 0
        %1052 = vmatpush2.bf16.xpose.msra.mxu0 0
        %1053 = vmatprep.subr.bf16.mxu0 0
        %1054 = vmatpush2.bf16.xpose.msra.mxu0 0
        %1055 = vmatprep.subr.bf16.mxu0 0
        %1056 = vmatpush2.bf16.xpose.msra.mxu0 0
        %1057 = vmatprep.subr.bf16.mxu0 0
        %1058 = vmatpush2.bf16.xpose.msra.mxu0 0
        %1059 = vmatprep.subr.bf16.mxu0 0
        %1060 = vmatpush2.bf16.xpose.msra.mxu0 0
        %1061 = vmatprep.subr.bf16.mxu0 0
        %1062 = vmatpush2.bf16.xpose.msra.mxu0 0
        %1063 = vmatprep.mubr.bf16.mxu0 0
        %1064 = vmatmul.mubr.bf16.gmra.mxu0 %v1026
        %v1065 = vpop.f32.mrf.mxu0
        %v1066 = vadd.f32 0.0, %v1065
        %v1067 = vpop.f32.mrf.mxu0
        %v1068 = vpop.f32.mrf.mxu0
        %v1069 = vpop.f32.mrf.mxu0
        %1070 = vdwg.mxu0
        %v1071 = vsel %vm541, %v1066, -1e+30
        %v1072 = vsel %vm545, %v1071, -inf
        %1073 = vmax.xlane.f32.xlu0 %v1072
        %v1074 = vpop.xlane.xlu0 %1073
        %v1075 = vsub.f32 %v1071, %v1074
        %v1076 = vmul.f32 %v1075, 1.442695
        %v1077 = vpow.pop %v1076
        %v1078 = vsel %vm545, %v1077, 0.0
        %1079 = vadd.xlane.f32.xlu0 %v1078
        %v1080 = vpop.xlane.xlu0 %1079
        %v1081 = vrcp.pop %v1080
        %v1082 = vmul.f32 %v1077, %v1081
        %v1083 = vpack.c.bf16 %v1082, %v1082
        %1084 = vrot.lane.b32.xlu0 %v536, 40
        %v1085 = vpop.permute.xlu0 %1084
        %v1087 = vsel %vm545, %v1083, 0
        %v1090 = vsel %vm610, %v1085, 0
        %1092 = vmatprep.subr.bf16.mxu0 0
        %1093 = vmatpush1.bf16.msra.mxu0 0
        %1094 = vmatprep.subr.bf16.mxu0 0
        %1095 = vmatpush1.bf16.msra.mxu0 0
        %1096 = vmatprep.subr.bf16.mxu0 0
        %1097 = vmatpush1.bf16.msra.mxu0 0
        %1098 = vmatprep.subr.bf16.mxu0 0
        %1099 = vmatpush1.bf16.msra.mxu0 0
        %1100 = vmatprep.subr.bf16.mxu0 0
        %1101 = vmatpush1.bf16.msra.mxu0 0
        %1102 = vmatprep.subr.bf16.mxu0 0
        %1103 = vmatpush1.bf16.msra.mxu0 0
        %1104 = vmatprep.subr.bf16.mxu0 0
        %1105 = vmatpush1.bf16.msra.mxu0 0
        %1106 = vmatprep.subr.bf16.mxu0 0
        %1107 = vmatpush1.bf16.msra.mxu0 %v1090
        %1108 = vmatprep.subr.bf16.mxu0 0
        %1109 = vmatpush2.bf16.msra.mxu0 0
        %1110 = vmatprep.subr.bf16.mxu0 0
        %1111 = vmatpush2.bf16.msra.mxu0 0
        %1112 = vmatprep.subr.bf16.mxu0 0
        %1113 = vmatpush2.bf16.msra.mxu0 0
        %1114 = vmatprep.subr.bf16.mxu0 0
        %1115 = vmatpush2.bf16.msra.mxu0 0
        %1116 = vmatprep.subr.bf16.mxu0 0
        %1117 = vmatpush2.bf16.msra.mxu0 0
        %1118 = vmatprep.subr.bf16.mxu0 0
        %1119 = vmatpush2.bf16.msra.mxu0 0
        %1120 = vmatprep.subr.bf16.mxu0 0
        %1121 = vmatpush2.bf16.msra.mxu0 0
        %1122 = vmatprep.subr.bf16.mxu0 0
        %1123 = vmatpush2.bf16.msra.mxu0 0
        %1124 = vmatprep.mubr.bf16.mxu0 0
        %1125 = vmatmul.mubr.bf16.gmra.mxu0 %v1087
        %v1126 = vpop.f32.mrf.mxu0
        %v1127 = vadd.f32 0.0, %v1126
        %v1128 = vpop.f32.mrf.mxu0
        %v1129 = vpop.f32.mrf.mxu0
        %v1130 = vpop.f32.mrf.mxu0
        %1131 = vdwg.mxu0
        %v1132 = vpack.c.bf16 %v1127, %v1127
        %v1133 = vld [vmem:[%s5 + $0xc] sm:$0xf]
        %v1135 = vsel %vm545, %v1132, 0
        %v1138 = vsel %vm610, %v1133, 0
        %1140 = vmatprep.subr.bf16.mxu0 0
        %1141 = vmatpush1.bf16.msra.mxu0 0
        %1142 = vmatprep.subr.bf16.mxu0 0
        %1143 = vmatpush1.bf16.msra.mxu0 0
        %1144 = vmatprep.subr.bf16.mxu0 0
        %1145 = vmatpush1.bf16.msra.mxu0 0
        %1146 = vmatprep.subr.bf16.mxu0 0
        %1147 = vmatpush1.bf16.msra.mxu0 0
        %1148 = vmatprep.subr.bf16.mxu0 0
        %1149 = vmatpush1.bf16.msra.mxu0 0
        %1150 = vmatprep.subr.bf16.mxu0 0
        %1151 = vmatpush1.bf16.msra.mxu0 0
        %1152 = vmatprep.subr.bf16.mxu0 0
        %1153 = vmatpush1.bf16.msra.mxu0 0
        %1154 = vmatprep.subr.bf16.mxu0 0
        %1155 = vmatpush1.bf16.msra.mxu0 %v1138
        %1156 = vmatprep.subr.bf16.mxu0 0
        %1157 = vmatpush2.bf16.msra.mxu0 0
        %1158 = vmatprep.subr.bf16.mxu0 0
        %1159 = vmatpush2.bf16.msra.mxu0 0
        %1160 = vmatprep.subr.bf16.mxu0 0
        %1161 = vmatpush2.bf16.msra.mxu0 0
        %1162 = vmatprep.subr.bf16.mxu0 0
        %1163 = vmatpush2.bf16.msra.mxu0 0
        %1164 = vmatprep.subr.bf16.mxu0 0
        %1165 = vmatpush2.bf16.msra.mxu0 0
        %1166 = vmatprep.subr.bf16.mxu0 0
        %1167 = vmatpush2.bf16.msra.mxu0 0
        %1168 = vmatprep.subr.bf16.mxu0 0
        %1169 = vmatpush2.bf16.msra.mxu0 0
        %1170 = vmatprep.subr.bf16.mxu0 0
        %1171 = vmatpush2.bf16.msra.mxu0 0
        %1172 = vmatprep.mubr.bf16.mxu0 0
        %1173 = vmatmul.mubr.bf16.gmra.mxu0 %v1135
        %v1174 = vpop.f32.mrf.mxu0
        %v1175 = vadd.f32 0.0, %v1174
        %v1176 = vpop.f32.mrf.mxu0
        %v1177 = vpop.f32.mrf.mxu0
        %v1178 = vpop.f32.mrf.mxu0
        %1179 = vdwg.mxu0
        %v1180 = vadd.f32 %v1020, %v1175
        %v1181 = vadd.f32 %v437, %v1180
        %v1182 = vld [vmem:[%s6] sm:$0x1]
        %v1184 = vlaneseq
        %v1185 = vshrl.u32 %v1184, 7
        %v1186 = vsub.s32 0, %v1185
        %v1187 = vrot.slane %v1182, %v1186
        %v1189 = vadd.f32 %v1181, %v1187
        %v1190 = vld [vmem:[%s7] sm:$0x1]
        %v1191 = vld [vmem:[%s8] sm:$0x1]
        %v1192 = vsel %vm440, %v1189, 0.0
        %1193 = vadd.xlane.f32.xlu0 %v1192
        %v1194 = vpop.xlane.xlu0 %1193
        %v1195 = vmul.f32 %v1194, %v444
        %v1196 = vsub.f32 %v1189, %v1195
        %v1197 = vmul.f32 %v1196, %v1196
        %v1198 = vsel %vm440, %v1197, 0.0
        %1199 = vadd.xlane.f32.xlu0 %v1198
        %v1200 = vpop.xlane.xlu0 %1199
        %v1201 = vmul.f32 %v1200, %v444
        %v1202 = vadd.f32 %v1201, 1e-05
        %v1203 = vrsqrt.pop %v1202
        %v1204 = vmul.f32 %v1196, %v1203
        %v1206 = vlaneseq
        %v1207 = vshrl.u32 %v1206, 7
        %v1208 = vsub.s32 0, %v1207
        %v1209 = vrot.slane %v1190, %v1208
        %v1211 = vmul.f32 %v1204, %v1209
        %v1213 = vlaneseq
        %v1214 = vshrl.u32 %v1213, 7
        %v1215 = vsub.s32 0, %v1214
        %v1216 = vrot.slane %v1191, %v1215
        %v1218 = vadd.f32 %v1211, %v1216
        %v1219 = vpack.c.bf16 %v1218, %v1218
        %v1220 = vld [vmem:[%s9] sm:$0xf]
        %v1221 = vld [vmem:[%s9 + $0x4] sm:$0xf]
        %v1222 = vld [vmem:[%s9 + $0x8] sm:$0xf]
        %v1223 = vld [vmem:[%s9 + $0xc] sm:$0xf]
        %v1224 = vld [vmem:[%s10] sm:$0x1]
        %v1226 = vlaneseq
        %v1227 = vshrl.u32 %v1226, 7
        %v1228 = vsub.s32 0, %v1227
        %v1229 = vrot.slane %v1224, %v1228
        %v1235 = vunpack.c.l.b16 %v1220
        %v1236 = vunpack.c.l.b16 %v1221
        %v1237 = vunpack.c.l.b16 %v1222
        %v1238 = vunpack.c.l.b16 %v1223
        %v1239 = vpack.c.b16 %v1236, %v1235
        %v1240 = vpack.c.b16 %v1238, %v1237
        %v1244 = vsel %vm440, %v1219, 0
        %1246 = vmatprep.subr.bf16.mxu0 0
        %1247 = vmatpush1.bf16.msra.mxu0 0
        %1248 = vmatprep.subr.bf16.mxu0 0
        %1249 = vmatpush1.bf16.msra.mxu0 0
        %1250 = vmatprep.subr.bf16.mxu0 0
        %1251 = vmatpush1.bf16.msra.mxu0 0
        %1252 = vmatprep.subr.bf16.mxu0 0
        %1253 = vmatpush1.bf16.msra.mxu0 0
        %1254 = vmatprep.subr.bf16.mxu0 0
        %1255 = vmatpush1.bf16.msra.mxu0 0
        %1256 = vmatprep.subr.bf16.mxu0 0
        %1257 = vmatpush1.bf16.msra.mxu0 0
        %1258 = vmatprep.subr.bf16.mxu0 0
        %1259 = vmatpush1.bf16.msra.mxu0 %v1240
        %1260 = vmatprep.subr.bf16.mxu0 0
        %1261 = vmatpush1.bf16.msra.mxu0 %v1239
        %1262 = vmatprep.subr.bf16.mxu0 0
        %1263 = vmatpush2.bf16.msra.mxu0 0
        %1264 = vmatprep.subr.bf16.mxu0 0
        %1265 = vmatpush2.bf16.msra.mxu0 0
        %1266 = vmatprep.subr.bf16.mxu0 0
        %1267 = vmatpush2.bf16.msra.mxu0 0
        %1268 = vmatprep.subr.bf16.mxu0 0
        %1269 = vmatpush2.bf16.msra.mxu0 0
        %1270 = vmatprep.subr.bf16.mxu0 0
        %1271 = vmatpush2.bf16.msra.mxu0 0
        %1272 = vmatprep.subr.bf16.mxu0 0
        %1273 = vmatpush2.bf16.msra.mxu0 0
        %1274 = vmatprep.subr.bf16.mxu0 0
        %1275 = vmatpush2.bf16.msra.mxu0 0
        %1276 = vmatprep.subr.bf16.mxu0 0
        %1277 = vmatpush2.bf16.msra.mxu0 0
        %1278 = vmatprep.mubr.bf16.mxu0 0
        %1279 = vmatmul.mubr.bf16.gmra.mxu0 %v1244
        %v1280 = vpop.f32.mrf.mxu0
        %v1281 = vadd.f32 %v1229, %v1280
        %v1282 = vpop.f32.mrf.mxu0
        %v1283 = vpop.f32.mrf.mxu0
        %v1284 = vpop.f32.mrf.mxu0
        %1285 = vdwg.mxu0
        %vm1286 = vcmp.ge.f32.partialorder %v1281, 0.0
        %v1287 = vmul.f32 %v1281, 0.01
        %v1288 = vsel %vm1286, %v1281, %v1287
        %v1289 = vpack.c.bf16 %v1288, %v1288
        %v1290 = vld [vmem:[%s11] sm:$0xf]
        %v1291 = vld [vmem:[%s11 + $0x4] sm:$0xf]
        %v1292 = vld [vmem:[%s11 + $0x8] sm:$0xf]
        %v1293 = vld [vmem:[%s11 + $0xc] sm:$0xf]
        %v1294 = vld [vmem:[%s11 + $0x10] sm:$0xf]
        %v1295 = vld [vmem:[%s11 + $0x14] sm:$0xf]
        %v1296 = vld [vmem:[%s11 + $0x18] sm:$0xf]
        %v1297 = vld [vmem:[%s11 + $0x1c] sm:$0xf]
        %v1298 = vld [vmem:[%s11 + $0x20] sm:$0xf]
        %v1299 = vld [vmem:[%s11 + $0x24] sm:$0xf]
        %v1300 = vld [vmem:[%s11 + $0x28] sm:$0xf]
        %v1301 = vld [vmem:[%s11 + $0x2c] sm:$0xf]
        %v1302 = vld [vmem:[%s11 + $0x30] sm:$0xf]
        %v1303 = vld [vmem:[%s11 + $0x34] sm:$0xf]
        %v1304 = vld [vmem:[%s11 + $0x38] sm:$0xf]
        %v1305 = vld [vmem:[%s11 + $0x3c] sm:$0xf]
        %v1322 = vunpack.c.l.b16 %v1290
        %v1323 = vunpack.c.l.b16 %v1291
        %v1324 = vunpack.c.l.b16 %v1292
        %v1325 = vunpack.c.l.b16 %v1293
        %v1326 = vunpack.c.l.b16 %v1294
        %v1327 = vunpack.c.l.b16 %v1295
        %v1328 = vunpack.c.l.b16 %v1296
        %v1329 = vunpack.c.l.b16 %v1297
        %v1330 = vunpack.c.l.b16 %v1298
        %v1331 = vunpack.c.l.b16 %v1299
        %v1332 = vunpack.c.l.b16 %v1300
        %v1333 = vunpack.c.l.b16 %v1301
        %v1334 = vunpack.c.l.b16 %v1302
        %v1335 = vunpack.c.l.b16 %v1303
        %v1336 = vunpack.c.l.b16 %v1304
        %v1337 = vunpack.c.l.b16 %v1305
        %v1338 = vpack.c.b16 %v1323, %v1322
        %v1339 = vpack.c.b16 %v1325, %v1324
        %v1340 = vpack.c.b16 %v1327, %v1326
        %v1341 = vpack.c.b16 %v1329, %v1328
        %v1342 = vpack.c.b16 %v1331, %v1330
        %v1343 = vpack.c.b16 %v1333, %v1332
        %v1344 = vpack.c.b16 %v1335, %v1334
        %v1345 = vpack.c.b16 %v1337, %v1336
        %1354 = vmatprep.subr.bf16.mxu0 0
        %1355 = vmatpush1.bf16.msra.mxu0 %v1345
        %1356 = vmatprep.subr.bf16.mxu0 0
        %1357 = vmatpush1.bf16.msra.mxu0 %v1344
        %1358 = vmatprep.subr.bf16.mxu0 0
        %1359 = vmatpush1.bf16.msra.mxu0 %v1343
        %1360 = vmatprep.subr.bf16.mxu0 0
        %1361 = vmatpush1.bf16.msra.mxu0 %v1342
        %1362 = vmatprep.subr.bf16.mxu0 0
        %1363 = vmatpush1.bf16.msra.mxu0 %v1341
        %1364 = vmatprep.subr.bf16.mxu0 0
        %1365 = vmatpush1.bf16.msra.mxu0 %v1340
        %1366 = vmatprep.subr.bf16.mxu0 0
        %1367 = vmatpush1.bf16.msra.mxu0 %v1339
        %1368 = vmatprep.subr.bf16.mxu0 0
        %1369 = vmatpush1.bf16.msra.mxu0 %v1338
        %1370 = vmatprep.subr.bf16.mxu0 0
        %1371 = vmatpush2.bf16.msra.mxu0 0
        %1372 = vmatprep.subr.bf16.mxu0 0
        %1373 = vmatpush2.bf16.msra.mxu0 0
        %1374 = vmatprep.subr.bf16.mxu0 0
        %1375 = vmatpush2.bf16.msra.mxu0 0
        %1376 = vmatprep.subr.bf16.mxu0 0
        %1377 = vmatpush2.bf16.msra.mxu0 0
        %1378 = vmatprep.subr.bf16.mxu0 0
        %1379 = vmatpush2.bf16.msra.mxu0 0
        %1380 = vmatprep.subr.bf16.mxu0 0
        %1381 = vmatpush2.bf16.msra.mxu0 0
        %1382 = vmatprep.subr.bf16.mxu0 0
        %1383 = vmatpush2.bf16.msra.mxu0 0
        %1384 = vmatprep.subr.bf16.mxu0 0
        %1385 = vmatpush2.bf16.msra.mxu0 0
        %1386 = vmatprep.mubr.bf16.mxu0 0
        %1387 = vmatmul.mubr.bf16.gmra.mxu0 %v1289
        %v1388 = vpop.f32.mrf.mxu0
        %v1389 = vadd.f32 0.0, %v1388
        %v1390 = vpop.f32.mrf.mxu0
        %v1391 = vpop.f32.mrf.mxu0
        %v1392 = vpop.f32.mrf.mxu0
        %1393 = vdwg.mxu0
        %v1394 = vadd.f32 %v1189, %v1389
        %v1395 = vld [vmem:[%s12] sm:$0x1]
        %v1397 = vlaneseq
        %v1398 = vshrl.u32 %v1397, 7
        %v1399 = vsub.s32 0, %v1398
        %v1400 = vrot.slane %v1395, %v1399
        %v1402 = vadd.f32 %v1394, %v1400
        %1403 = vst.msk [vmem:[%s431] sm:$0xff] %vm440, %v1402
        %s1404 = sand.u32 %s313, 1
        %s1405 = scalar_lea.sflag [#allocation3], %s1404
        %s1406 = sand.u32 %s313, 1
        %s1407 = smul.addr %s1406, 8
        %s1408 = scalar_lea.vmem [#allocation2], %s1407
        // Predicated region
        $region73: #{tpu_custom_call.1} parent=71 // pred_check
          %p1409 = pneg %p323
        $region74: #{tpu_custom_call.1} parent=71 // pred_check_branch
          %1411 = sbr.rel (%p1409) target = $region76
        $region75: #{tpu_custom_call.1} parent=71 // pred_region
          %s1413 = ssub.s32 128, 128
          %1414 = vsyncadd %s1405, %s1413
          %s1415 = smul.addr %s27, 128
          %s1416 = scalar_lea.hbm %s13, %s1415
          %s1418 = sshll.u32 %s1408, 4
          %s1419 = int_to_ptr.vmem [resolvable:$true] %s1418
          %1421 = dma.vmem_to_hbm [thread:$0]  %s1419, 128, %s1416, %s1405
        $region76: #{tpu_custom_call.1} parent=71 // pred_fallthru
          _
      $region72: #{tpu_custom_call.1} parent=5 // pred_fallthru
        _
      %p1422 = scmp.le.s32.totalorder 2, %s22
      // Predicated region
      $region77: #{tpu_custom_call.1} parent=5 // pred_check
        %p1423 = pneg %p1422
      $region78: #{tpu_custom_call.1} parent=5 // pred_check_branch
        %1425 = sbr.rel (%p1423) target = $region80
      $region79: #{tpu_custom_call.1} parent=5 // pred_region
        %s1426 = ssub.s32 %s22, 2
        // Predicated region
        $region81: #{tpu_custom_call.1} parent=79 // pred_check
          %p1427 = pneg %p329
        $region82: #{tpu_custom_call.1} parent=79 // pred_check_branch
          %1429 = sbr.rel (%p1427) target = $region84
        $region83: #{tpu_custom_call.1} parent=79 // pred_region
          %s1430 = sand.u32 %s314, 1
          %s1431 = scalar_lea.sflag [#allocation3], %s1430
          %s1432 = sand.u32 %s314, 1
          %s1433 = smul.addr %s1432, 8
          %s1434 = scalar_lea.vmem [#allocation2], %s1433
          %1435 = dma.done %s1431, 128
        $region84: #{tpu_custom_call.1} parent=79 // pred_fallthru
          _
      $region80: #{tpu_custom_call.1} parent=5 // pred_fallthru
        _
    $region6: #{tpu_custom_call.1} parent=1 // loop_footer
      %s26 = sadd.s32 1, %s22
    $region7: #{tpu_custom_call.1} parent=1 // loop_footer_branch
      %21 = sbr.rel target = $region3
    $region8: #{tpu_custom_call.1} parent=1 // loop_exit
      _
    %1436 = vsyncpa [#allocation3], 1
    %s1437 = scalar_lea.sflag [#allocation3], 1
    %1438 = vsyncpa %s1437, 1

</llo_original>
